<compile_context>
chip_gen: v5e
topology: v5e:2x2
jax: 0.10.0
libtpu: 0.0.40
codegen_flags: <defaults>
</compile_context>

<pallas_src>
import math
import functools

import jax
import jax.numpy as jnp
from jax import lax
from jax.experimental import pallas as pl
from jax.experimental.pallas import tpu as pltpu


# ----------------------------------------------------------------------------- kernel

def _lta_fused_kernel(kpad_ref, q_ref, wc_ref, bc_ref, gT_ref, wkvT_ref,
                      wmu_ref, wsig_ref, bmu_ref, bsig_ref, woT_ref,
                      out_ref, kl_ref, *, n_heads, d_head, sigma_0, mu_0):
    """Fused LongTermAttention forward for one query block, whole batch.

    kpad_ref : (B, L+2, D) f32   zero-padded keys, time on sublanes, features on lanes
    q_ref    : (B, QB, D)  f32   query block for this grid step
    wc_ref   : (3, D, D)   bf16  conv1d taps, wc_ref[j] = W[:, :, j].T
    bc_ref   : (1, D)      f32   conv1d bias
    gT_ref   : (N, L)      f32   basis regression matrix G^T (kept f32)
    wkvT_ref : (D, 2D)     bf16  [proj_key.weight.T | proj_value.weight.T]
    wmu_ref  : (1, N)      f32   mu.weight
    wsig_ref : (1, N)      f32   sigma.weight
    bmu_ref  : (1, N)      f32   basis mus
    bsig_ref : (1, N)      f32   basis sigmas
    woT_ref  : (D, Dm)     bf16  attn_out.weight.T
    out_ref  : (B, QB, Dm) f32   context block
    kl_ref   : (B, H, QB)  f32   KL regularizer block (head-major, matches torch view)
    """
    f32, bf16 = jnp.float32, jnp.bfloat16
    B, Lp2, D = kpad_ref.shape
    L = Lp2 - 2
    N = gT_ref.shape[0]
    QB = q_ref.shape[1]
    H, Dh = n_heads, d_head
    Dm = woT_ref.shape[1]

    kpad = kpad_ref[...]                                            # (B, L+2, D) f32

    # --- conv1d(kernel=3, padding=1) mask: three accumulated dots (no lane concat) ----
    conv = bc_ref[...]                                              # (1, D) -> broadcast
    for j in range(3):                                              # static unroll
        tap = kpad[:, j:j + L, :].reshape(B * L, D)                 # (B*L, D)
        conv = conv + jnp.dot(tap.astype(bf16), wc_ref[j],
                              preferred_element_type=f32)           # (B*L, D) f32
    kt = kpad[:, 1:L + 1, :].reshape(B * L, D)                      # unshifted keys
    km = kt * jax.nn.sigmoid(conv)                                  # masked keys (B*L, D)

    # --- basis regression B^T = G^T @ km (f32 for accuracy), key/value projections ----
    gT = gT_ref[...]                                                # (N, L) f32
    bT = jnp.concatenate(
        [jnp.dot(gT, km[b * L:(b + 1) * L, :], preferred_element_type=f32)
         for b in range(B)], axis=0)                                # (B*N, D) f32
    kv = jnp.dot(bT.astype(bf16), wkvT_ref[...],
                 preferred_element_type=f32).reshape(B, N, 2 * D)   # (B, N, 2D)
    keys_bf = kv[:, :, :D].astype(bf16)                             # (B, N, D)
    vals_bf = kv[:, :, D:].astype(bf16)                             # (B, N, D)

    # --- continuous attention, per head (static unroll, lane slices) ------------------
    scale = 1.0 / math.sqrt(Dh)
    q_bf = (q_ref[...] * scale).astype(bf16)                        # cast once (B, QB, D)

    wmu = wmu_ref[...].reshape(1, 1, N)
    wsig = wsig_ref[...].reshape(1, 1, N)
    bmu = bmu_ref[...].reshape(1, 1, N)
    bsig2 = (bsig_ref[...] * bsig_ref[...]).reshape(1, 1, N)
    woT = woT_ref[...]                                              # (D, Dm) bf16
    s0sq = sigma_0 * sigma_0
    inv_sqrt_2pi = 1.0 / math.sqrt(2.0 * math.pi)

    out_acc = jnp.zeros((B * QB, Dm), f32)
    kl_parts = []
    for h in range(H):
        lo = h * Dh
        qh = q_bf[:, :, lo:lo + Dh]                                 # (B, QB, Dh)
        kh = keys_bf[:, :, lo:lo + Dh]                              # (B, N, Dh)
        vh = vals_bf[:, :, lo:lo + Dh]                              # (B, N, Dh)

        scores = jnp.einsum('bqd,bnd->bqn', qh, kh,
                            preferred_element_type=f32)             # (B, QB, N) f32

        # mu / sigma projections as VPU multiply + lane reduce (no 2-lane MXU output)
        mu = jax.nn.sigmoid(jnp.sum(scores * wmu, axis=-1, keepdims=True))   # (B,QB,1)
        sig = jnp.maximum(
            jax.nn.softplus(jnp.sum(scores * wsig, axis=-1, keepdims=True)), 1e-6)

        kl = 0.5 * (sig / s0sq - jnp.log(sig / s0sq) - 1.0
                    + (mu - mu_0) ** 2 / s0sq)                      # (B, QB, 1)
        kl_parts.append(kl[:, :, 0])                                # (B, QB), q on lanes

        # ContinuousSoftmax fwd (Gaussian basis): r = N(mu; basis_mu, basis_sigma^2+sig)
        inv_std = lax.rsqrt(bsig2 + sig)                            # (B, QB, N)
        z = (mu - bmu) * inv_std
        r = inv_sqrt_2pi * jnp.exp(-0.5 * z * z) * inv_std          # (B, QB, N) f32

        ctx = jnp.einsum('bqn,bnd->bqd', r.astype(bf16), vh,
                         preferred_element_type=f32)                # (B, QB, Dh)
        out_acc = out_acc + jnp.dot(ctx.reshape(B * QB, Dh).astype(bf16),
                                    woT[lo:lo + Dh, :],
                                    preferred_element_type=f32)     # (B*QB, Dm)

    out_ref[...] = out_acc.reshape(B, QB, Dm)
    kl_ref[...] = jnp.stack(kl_parts, axis=1)                       # (B, H, QB)


# ----------------------------------------------------------------------------- wrapper

def _run_fused(kpad, qblocks, pp, *, n_heads, d_head, sigma_0, mu_0):
    B, Lp2, D = kpad.shape
    n_qb, _, QB, _ = qblocks.shape
    N, L = pp["gT"].shape
    Dm = pp["woT"].shape[1]
    H = n_heads

    def _const(shape):
        # Grid-invariant input: full block, constant index, single buffer.
        if len(shape) == 2:
            idx = lambda i: (0, 0)
        else:
            idx = lambda i: (0, 0, 0)
        return pl.BlockSpec(shape, idx, pipeline_mode=pl.Buffered(1))

    kernel = functools.partial(_lta_fused_kernel, n_heads=n_heads, d_head=d_head,
                               sigma_0=sigma_0, mu_0=mu_0)
    return pl.pallas_call(
        kernel,
        grid=(n_qb,),
        in_specs=[
            _const((B, Lp2, D)),                                     # kpad
            pl.BlockSpec((None, B, QB, D), lambda i: (i, 0, 0, 0)),  # q block
            _const((3, D, D)),                                       # conv taps (bf16)
            _const((1, D)),                                          # conv bias
            _const((N, L)),                                          # G^T (f32)
            _const((D, 2 * D)),                                      # [wkT|wvT] (bf16)
            _const((1, N)),                                          # mu.weight
            _const((1, N)),                                          # sigma.weight
            _const((1, N)),                                          # basis mu
            _const((1, N)),                                          # basis sigma
            _const((D, Dm)),                                         # woT (bf16)
        ],
        out_specs=(pl.BlockSpec((None, B, QB, Dm), lambda i: (i, 0, 0, 0)),
                   pl.BlockSpec((None, B, H, QB), lambda i: (i, 0, 0, 0))),
        out_shape=(jax.ShapeDtypeStruct((n_qb, B, QB, Dm), jnp.float32),
                   jax.ShapeDtypeStruct((n_qb, B, H, QB), jnp.float32)),
        compiler_params=pltpu.CompilerParams(
            dimension_semantics=("parallel",),
            vmem_limit_bytes=48 * 1024 * 1024),
    )(kpad, qblocks, pp["wc"], pp["bc"], pp["gT"], pp["wkvT"],
      pp["wmu"], pp["wsig"], pp["basis_mu"], pp["basis_sigma"], pp["woT"])


@functools.partial(jax.jit, static_argnames=("n_heads", "head_size", "sigma_0", "mu_0"))
def long_term_attention_forward(k, q, packed, *, n_heads, head_size,
                                sigma_0=1.0, mu_0=0.0):
    """Pallas implementation of LongTermAttention.forward (B_past=None path)."""
    klen, batch, d = k.shape
    qlen = q.shape[0]
    H, Dh = n_heads, head_size
    Dm = packed["woT"].shape[1]

    n_qb = 2 if qlen % 2 == 0 else 1        # >=2 parallel steps feed both v7x TCs
    QB = qlen // n_qb

    # Minimal glue: layout only (time on sublanes, features on lanes), pad once.
    kt = jnp.transpose(k, (1, 0, 2))                                # (B, L, D)
    kpad = jnp.pad(kt, ((0, 0), (1, 1), (0, 0)))                    # (B, L+2, D)
    qblocks = (jnp.transpose(q, (1, 0, 2))                          # (B, Q, D)
               .reshape(batch, n_qb, QB, d)
               .transpose(1, 0, 2, 3))                              # (n_qb, B, QB, D)

    out, kl = _run_fused(kpad, qblocks, packed, n_heads=H, d_head=Dh,
                         sigma_0=sigma_0, mu_0=mu_0)

    context = out.transpose(0, 2, 1, 3).reshape(qlen, batch, Dm)    # (qlen, batch, Dm)
    kl_reg = kl.transpose(1, 2, 0, 3).reshape(batch, H * qlen)      # head-major (torch)
    return context, kl_reg


def pack_params(nat):
    """One-time repack of natural (torch-layout) weights into kernel layout."""
    wc = nat["wc"]                                                  # (Dout, Din, 3)
    wc_taps = jnp.stack([wc[:, :, j].T for j in range(3)], axis=0)  # (3, Din, Dout)
    return dict(
        wc=wc_taps.astype(jnp.bfloat16),
        bc=nat["bc"][None, :].astype(jnp.float32),                  # (1, D)
        gT=nat["G"].T.astype(jnp.float32),                          # (N, L), kept f32
        wkvT=jnp.concatenate([nat["wk"].T, nat["wv"].T], axis=1).astype(jnp.bfloat16),
        wmu=nat["wmu"].astype(jnp.float32),                         # (1, N)
        wsig=nat["wsig"].astype(jnp.float32),                       # (1, N)
        woT=nat["wo"].T.astype(jnp.bfloat16),                       # (D, Dm)
        basis_mu=nat["basis_mu"].astype(jnp.float32),               # (1, N)
        basis_sigma=nat["basis_sigma"].astype(jnp.float32),         # (1, N)
    )


# ----------------------------------------------------------------------------- setup / reference

def build_basis(attn_num_basis):
    nb = attn_num_basis
    sigmas = jnp.array([0.01, 0.05], dtype=jnp.float32)
    mus = jnp.linspace(0.0, 1.0, nb // 2).astype(jnp.float32)
    basis_mu = jnp.repeat(mus, 2)[None, :]              # torch.meshgrid 'ij' flatten
    basis_sigma = jnp.tile(sigmas, nb // 2)[None, :]
    return basis_mu, basis_sigma


def build_G(klen, basis_mu, basis_sigma, ridge=1.0):
    pos = jnp.arange(1, klen + 1, dtype=jnp.float32) / klen
    t = pos[:, None]
    F = (jnp.exp(-0.5 * ((t - basis_mu) / basis_sigma) ** 2)
         / (math.sqrt(2.0 * math.pi) * basis_sigma)).T              # (N, klen)
    A = F @ F.T + ridge * jnp.eye(F.shape[0], dtype=jnp.float32)
    G = jnp.linalg.solve(A, F).T                                    # (klen, N)
    return G


def reference_forward(k, q, nat, *, n_heads, head_size, sigma_0=1.0, mu_0=0.0):
    """Pure-JAX f32 reference faithful to the PyTorch forward (B_past=None)."""
    klen, batch, d = k.shape
    qlen = q.shape[0]
    H, Dh = n_heads, head_size
    N = nat["basis_mu"].shape[1]

    kperm = jnp.transpose(k, (1, 2, 0))                             # (B, d, L)
    kpad = jnp.pad(kperm, ((0, 0), (0, 0), (1, 1)))
    wc = nat["wc"]
    conv = sum(jnp.einsum("oi,bil->bol", wc[:, :, j], kpad[:, :, j:j + klen])
               for j in range(3))
    conv = conv + nat["bc"][None, :, None]
    km = kperm * jax.nn.sigmoid(conv)
    Bmat = jnp.einsum("bdl,ln->bdn", km, nat["G"])
    Bt = jnp.transpose(Bmat, (0, 2, 1))                             # (B, N, d)
    keys = Bt @ nat["wk"].T
    values = Bt @ nat["wv"].T

    query = jnp.transpose(q, (1, 0, 2)).reshape(batch, qlen, H, Dh).transpose(0, 2, 1, 3)
    keys4 = keys.reshape(batch, N, H, Dh).transpose(0, 2, 1, 3)
    vals4 = values.reshape(batch, N, H, Dh).transpose(0, 2, 1, 3)

    scores = jnp.einsum("bhqe,bhne->bhqn", query / math.sqrt(Dh), keys4)
    mu = jax.nn.sigmoid(scores @ nat["wmu"].T)
    sig = jnp.maximum(jax.nn.softplus(scores @ nat["wsig"].T), 1e-6)
    s0sq = sigma_0 ** 2
    kl = 0.5 * (sig / s0sq - jnp.log(sig / s0sq) - 1.0 + (mu - mu_0) ** 2 / s0sq)

    var = nat["basis_sigma"] ** 2 + sig
    z = (mu - nat["basis_mu"]) / jnp.sqrt(var)
    r = jnp.exp(-0.5 * z * z) / (math.sqrt(2.0 * math.pi) * jnp.sqrt(var))

    ctx = jnp.einsum("bhqn,bhne->bhqe", r, vals4)
    ctx = jnp.transpose(ctx, (0, 2, 1, 3)).reshape(batch, qlen, H * Dh)
    out = ctx @ nat["wo"].T
    return jnp.transpose(out, (1, 0, 2)), kl.reshape(batch, H * qlen)


# ----------------------------------------------------------------------------- main

if __name__ == "__main__":
    batch = 2
    n_heads = 2
    head_size = 8
    d = n_heads * head_size          # 16
    d_model = 16
    qlen = 8
    klen = 8                         # == length
    attn_num_basis = 16              # even, consistent with sigmas=[0.01, 0.05]

    key = jax.random.PRNGKey(0)
    ks = jax.random.split(key, 10)
    wk = (jax.random.normal(ks[0], (d, d)) * 0.1).astype(jnp.float32)        # proj_key.weight
    wv = (jax.random.normal(ks[1], (d, d)) * 0.1).astype(jnp.float32)        # proj_value.weight
    wo = (jax.random.normal(ks[2], (d_model, d)) * 0.1).astype(jnp.float32)  # attn_out.weight
    wmu = (jax.random.normal(ks[3], (1, attn_num_basis)) * 0.1).astype(jnp.float32)
    wsg = (jax.random.normal(ks[4], (1, attn_num_basis)) * 0.1).astype(jnp.float32)
    wc = (jax.random.normal(ks[5], (d, d, 3)) * 0.1).astype(jnp.float32)     # conv1d weight
    bc = (jax.random.normal(ks[6], (d,)) * 0.1).astype(jnp.float32)          # conv1d bias
    k_in = jax.random.normal(ks[7], (klen, batch, d), dtype=jnp.float32)
    q_in = jax.random.normal(ks[8], (qlen, batch, d), dtype=jnp.float32)

    basis_mu, basis_sigma = build_basis(attn_num_basis)
    G = build_G(klen, basis_mu, basis_sigma, ridge=1.0)

    # NOTE: proj_query and attn_dropout are defined in __init__ but never used in forward.
    natural = dict(wk=wk, wv=wv, wo=wo, wmu=wmu, wsig=wsg, wc=wc, bc=bc, G=G,
                   basis_mu=basis_mu, basis_sigma=basis_sigma)
    packed = pack_params(natural)

    ctx, kl_reg = long_term_attention_forward(k_in, q_in, packed,
                                              n_heads=n_heads, head_size=head_size,
                                              sigma_0=1.0, mu_0=0.0)
    ctx = jax.block_until_ready(ctx)
    kl_reg = jax.block_until_ready(kl_reg)

    ctx_ref, kl_ref = reference_forward(k_in, q_in, natural,
                                        n_heads=n_heads, head_size=head_size,
                                        sigma_0=1.0, mu_0=0.0)

    def _close(a, b):
        return float(jnp.max(jnp.abs(a - b))) <= 1e-2 * (1.0 + float(jnp.max(jnp.abs(b))))

    assert ctx.shape == (qlen, batch, d_model), ctx.shape
    assert kl_reg.shape == (batch, n_heads * qlen), kl_reg.shape
    assert _close(ctx, ctx_ref), "context mismatch vs reference"
    assert _close(kl_reg, kl_ref), "kl_reg mismatch vs reference"

    print("KERNEL_OK")
</pallas_src>

<mosaic_0001>
module attributes {stable_mosaic.version = 11 : i64} {
  func.func @_lta_fused_kernel(%arg0: i32, %arg1: memref<2x10x16xf32, #tpu.memory_space<vmem>>, %arg2: memref<1x2x4x16xf32, #tpu.memory_space<vmem>>, %arg3: memref<3x16x16xbf16, #tpu.memory_space<vmem>>, %arg4: memref<1x16xf32, #tpu.memory_space<vmem>>, %arg5: memref<16x8xf32, #tpu.memory_space<vmem>>, %arg6: memref<16x32xbf16, #tpu.memory_space<vmem>>, %arg7: memref<1x16xf32, #tpu.memory_space<vmem>>, %arg8: memref<1x16xf32, #tpu.memory_space<vmem>>, %arg9: memref<1x16xf32, #tpu.memory_space<vmem>>, %arg10: memref<1x16xf32, #tpu.memory_space<vmem>>, %arg11: memref<16x16xbf16, #tpu.memory_space<vmem>>, %arg12: memref<1x2x4x16xf32, #tpu.memory_space<vmem>>, %arg13: memref<1x2x2x4xf32, #tpu.memory_space<vmem>>) attributes {dimension_semantics = [#tpu.dimension_semantics<parallel>], iteration_bounds = array<i64: 2>, scalar_prefetch = 0 : i64, scratch_operands = 0 : i64, tpu.core_type = #tpu.core_type<tc>, window_params = [{pipeline_mode = #tpu.pipeline_mode<synchronous>, transform_indices = @transform_0, window_bounds = array<i64: 2, 10, 16>}, {transform_indices = @transform_1, window_bounds = array<i64: 1, 2, 4, 16>}, {pipeline_mode = #tpu.pipeline_mode<synchronous>, transform_indices = @transform_2, window_bounds = array<i64: 3, 16, 16>}, {pipeline_mode = #tpu.pipeline_mode<synchronous>, transform_indices = @transform_3, window_bounds = array<i64: 1, 16>}, {pipeline_mode = #tpu.pipeline_mode<synchronous>, transform_indices = @transform_4, window_bounds = array<i64: 16, 8>}, {pipeline_mode = #tpu.pipeline_mode<synchronous>, transform_indices = @transform_5, window_bounds = array<i64: 16, 32>}, {pipeline_mode = #tpu.pipeline_mode<synchronous>, transform_indices = @transform_6, window_bounds = array<i64: 1, 16>}, {pipeline_mode = #tpu.pipeline_mode<synchronous>, transform_indices = @transform_7, window_bounds = array<i64: 1, 16>}, {pipeline_mode = #tpu.pipeline_mode<synchronous>, transform_indices = @transform_8, window_bounds = array<i64: 1, 16>}, {pipeline_mode = #tpu.pipeline_mode<synchronous>, transform_indices = @transform_9, window_bounds = array<i64: 1, 16>}, {pipeline_mode = #tpu.pipeline_mode<synchronous>, transform_indices = @transform_10, window_bounds = array<i64: 16, 16>}, {transform_indices = @transform_11, window_bounds = array<i64: 1, 2, 4, 16>}, {transform_indices = @transform_12, window_bounds = array<i64: 1, 2, 2, 4>}]} {
    %c0 = arith.constant 0 : index
    %c0_0 = arith.constant 0 : index
    %c0_1 = arith.constant 0 : index
    %0 = vector.load %arg1[%c0, %c0_0, %c0_1] : memref<2x10x16xf32, #tpu.memory_space<vmem>>, vector<2x10x16xf32>
    %c0_2 = arith.constant 0 : index
    %c0_3 = arith.constant 0 : index
    %1 = vector.load %arg4[%c0_2, %c0_3] : memref<1x16xf32, #tpu.memory_space<vmem>>, vector<1x16xf32>
    %2 = vector.extract_strided_slice %0 {offsets = [0, 0, 0], sizes = [2, 8, 16], strides = [1, 1, 1]} : vector<2x10x16xf32> to vector<2x8x16xf32>
    %3 = vector.shape_cast %2 : vector<2x8x16xf32> to vector<16x16xf32>
    %4 = arith.truncf %3 : vector<16x16xf32> to vector<16x16xbf16>
    %c0_4 = arith.constant 0 : index
    %c0_5 = arith.constant 0 : index
    %c0_6 = arith.constant 0 : index
    %5 = vector.load %arg3[%c0_4, %c0_5, %c0_6] : memref<3x16x16xbf16, #tpu.memory_space<vmem>>, vector<1x16x16xbf16>
    %6 = vector.shape_cast %5 : vector<1x16x16xbf16> to vector<16x16xbf16>
    %cst = arith.constant dense<0.000000e+00> : vector<16x16xf32>
    %7 = tpu.matmul %4, %6, %cst {dimension_numbers = #tpu.dot_dimension_numbers<[1], [0], [0], [1], [0, 0, 1, 1], [], []>} : vector<16x16xbf16>, vector<16x16xbf16>, vector<16x16xf32> -> vector<16x16xf32>
    %8 = vector.broadcast %1 : vector<1x16xf32> to vector<16x16xf32>
    %9 = arith.addf %8, %7 : vector<16x16xf32>
    %10 = vector.extract_strided_slice %0 {offsets = [0, 1, 0], sizes = [2, 8, 16], strides = [1, 1, 1]} : vector<2x10x16xf32> to vector<2x8x16xf32>
    %11 = vector.shape_cast %10 : vector<2x8x16xf32> to vector<16x16xf32>
    %12 = arith.truncf %11 : vector<16x16xf32> to vector<16x16xbf16>
    %c1 = arith.constant 1 : index
    %c0_7 = arith.constant 0 : index
    %c0_8 = arith.constant 0 : index
    %13 = vector.load %arg3[%c1, %c0_7, %c0_8] : memref<3x16x16xbf16, #tpu.memory_space<vmem>>, vector<1x16x16xbf16>
    %14 = vector.shape_cast %13 : vector<1x16x16xbf16> to vector<16x16xbf16>
    %cst_9 = arith.constant dense<0.000000e+00> : vector<16x16xf32>
    %15 = tpu.matmul %12, %14, %cst_9 {dimension_numbers = #tpu.dot_dimension_numbers<[1], [0], [0], [1], [0, 0, 1, 1], [], []>} : vector<16x16xbf16>, vector<16x16xbf16>, vector<16x16xf32> -> vector<16x16xf32>
    %16 = arith.addf %9, %15 : vector<16x16xf32>
    %17 = vector.extract_strided_slice %0 {offsets = [0, 2, 0], sizes = [2, 8, 16], strides = [1, 1, 1]} : vector<2x10x16xf32> to vector<2x8x16xf32>
    %18 = vector.shape_cast %17 : vector<2x8x16xf32> to vector<16x16xf32>
    %19 = arith.truncf %18 : vector<16x16xf32> to vector<16x16xbf16>
    %c2 = arith.constant 2 : index
    %c0_10 = arith.constant 0 : index
    %c0_11 = arith.constant 0 : index
    %20 = vector.load %arg3[%c2, %c0_10, %c0_11] : memref<3x16x16xbf16, #tpu.memory_space<vmem>>, vector<1x16x16xbf16>
    %21 = vector.shape_cast %20 : vector<1x16x16xbf16> to vector<16x16xbf16>
    %cst_12 = arith.constant dense<0.000000e+00> : vector<16x16xf32>
    %22 = tpu.matmul %19, %21, %cst_12 {dimension_numbers = #tpu.dot_dimension_numbers<[1], [0], [0], [1], [0, 0, 1, 1], [], []>} : vector<16x16xbf16>, vector<16x16xbf16>, vector<16x16xf32> -> vector<16x16xf32>
    %23 = arith.addf %16, %22 : vector<16x16xf32>
    %24 = vector.extract_strided_slice %0 {offsets = [0, 1, 0], sizes = [2, 8, 16], strides = [1, 1, 1]} : vector<2x10x16xf32> to vector<2x8x16xf32>
    %25 = vector.shape_cast %24 : vector<2x8x16xf32> to vector<16x16xf32>
    %26 = arith.negf %23 : vector<16x16xf32>
    %27 = math.exp %26 : vector<16x16xf32>
    %cst_13 = arith.constant 1.000000e+00 : f32
    %28 = vector.broadcast %cst_13 : f32 to vector<16x16xf32>
    %29 = arith.addf %28, %27 : vector<16x16xf32>
    %30 = arith.divf %28, %29 : vector<16x16xf32>
    %31 = arith.mulf %25, %30 : vector<16x16xf32>
    %c0_14 = arith.constant 0 : index
    %c0_15 = arith.constant 0 : index
    %32 = vector.load %arg5[%c0_14, %c0_15] : memref<16x8xf32, #tpu.memory_space<vmem>>, vector<16x8xf32>
    %33 = vector.extract_strided_slice %31 {offsets = [0, 0], sizes = [8, 16], strides = [1, 1]} : vector<16x16xf32> to vector<8x16xf32>
    %cst_16 = arith.constant dense<0.000000e+00> : vector<16x16xf32>
    %34 = tpu.matmul %32, %33, %cst_16 {dimension_numbers = #tpu.dot_dimension_numbers<[1], [0], [0], [1], [0, 0, 1, 1], [], []>} : vector<16x8xf32>, vector<8x16xf32>, vector<16x16xf32> -> vector<16x16xf32>
    %35 = vector.extract_strided_slice %31 {offsets = [8, 0], sizes = [8, 16], strides = [1, 1]} : vector<16x16xf32> to vector<8x16xf32>
    %cst_17 = arith.constant dense<0.000000e+00> : vector<16x16xf32>
    %36 = tpu.matmul %32, %35, %cst_17 {dimension_numbers = #tpu.dot_dimension_numbers<[1], [0], [0], [1], [0, 0, 1, 1], [], []>} : vector<16x8xf32>, vector<8x16xf32>, vector<16x16xf32> -> vector<16x16xf32>
    %37 = tpu.concatenate %34, %36 in 0 : vector<16x16xf32>, vector<16x16xf32> -> vector<32x16xf32>
    %38 = arith.truncf %37 : vector<32x16xf32> to vector<32x16xbf16>
    %c0_18 = arith.constant 0 : index
    %c0_19 = arith.constant 0 : index
    %39 = vector.load %arg6[%c0_18, %c0_19] : memref<16x32xbf16, #tpu.memory_space<vmem>>, vector<16x32xbf16>
    %cst_20 = arith.constant dense<0.000000e+00> : vector<32x32xf32>
    %40 = tpu.matmul %38, %39, %cst_20 {dimension_numbers = #tpu.dot_dimension_numbers<[1], [0], [0], [1], [0, 0, 1, 1], [], []>} : vector<32x16xbf16>, vector<16x32xbf16>, vector<32x32xf32> -> vector<32x32xf32>
    %41 = vector.shape_cast %40 : vector<32x32xf32> to vector<2x16x32xf32>
    %42 = vector.extract_strided_slice %41 {offsets = [0, 0, 0], sizes = [2, 16, 16], strides = [1, 1, 1]} : vector<2x16x32xf32> to vector<2x16x16xf32>
    %43 = arith.truncf %42 : vector<2x16x16xf32> to vector<2x16x16xbf16>
    %44 = vector.extract_strided_slice %41 {offsets = [0, 0, 16], sizes = [2, 16, 16], strides = [1, 1, 1]} : vector<2x16x32xf32> to vector<2x16x16xf32>
    %45 = arith.truncf %44 : vector<2x16x16xf32> to vector<2x16x16xbf16>
    %c0_21 = arith.constant 0 : index
    %c0_22 = arith.constant 0 : index
    %c0_23 = arith.constant 0 : index
    %c0_24 = arith.constant 0 : index
    %46 = vector.load %arg2[%c0_21, %c0_22, %c0_23, %c0_24] : memref<1x2x4x16xf32, #tpu.memory_space<vmem>>, vector<1x2x4x16xf32>
    %47 = vector.shape_cast %46 : vector<1x2x4x16xf32> to vector<2x4x16xf32>
    %cst_25 = arith.constant 0.353553385 : f32
    %48 = vector.broadcast %cst_25 : f32 to vector<2x4x16xf32>
    %49 = arith.mulf %47, %48 : vector<2x4x16xf32>
    %50 = arith.truncf %49 : vector<2x4x16xf32> to vector<2x4x16xbf16>
    %c0_26 = arith.constant 0 : index
    %c0_27 = arith.constant 0 : index
    %51 = vector.load %arg7[%c0_26, %c0_27] : memref<1x16xf32, #tpu.memory_space<vmem>>, vector<1x16xf32>
    %52 = vector.shape_cast %51 : vector<1x16xf32> to vector<1x1x16xf32>
    %c0_28 = arith.constant 0 : index
    %c0_29 = arith.constant 0 : index
    %53 = vector.load %arg8[%c0_28, %c0_29] : memref<1x16xf32, #tpu.memory_space<vmem>>, vector<1x16xf32>
    %54 = vector.shape_cast %53 : vector<1x16xf32> to vector<1x1x16xf32>
    %c0_30 = arith.constant 0 : index
    %c0_31 = arith.constant 0 : index
    %55 = vector.load %arg9[%c0_30, %c0_31] : memref<1x16xf32, #tpu.memory_space<vmem>>, vector<1x16xf32>
    %56 = vector.shape_cast %55 : vector<1x16xf32> to vector<1x1x16xf32>
    %c0_32 = arith.constant 0 : index
    %c0_33 = arith.constant 0 : index
    %57 = vector.load %arg10[%c0_32, %c0_33] : memref<1x16xf32, #tpu.memory_space<vmem>>, vector<1x16xf32>
    %c0_34 = arith.constant 0 : index
    %c0_35 = arith.constant 0 : index
    %58 = vector.load %arg10[%c0_34, %c0_35] : memref<1x16xf32, #tpu.memory_space<vmem>>, vector<1x16xf32>
    %59 = arith.mulf %57, %58 : vector<1x16xf32>
    %60 = vector.shape_cast %59 : vector<1x16xf32> to vector<1x1x16xf32>
    %c0_36 = arith.constant 0 : index
    %c0_37 = arith.constant 0 : index
    %61 = vector.load %arg11[%c0_36, %c0_37] : memref<16x16xbf16, #tpu.memory_space<vmem>>, vector<16x16xbf16>
    %cst_38 = arith.constant 0.000000e+00 : f32
    %62 = vector.broadcast %cst_38 : f32 to vector<8x16xf32>
    %63 = vector.extract_strided_slice %50 {offsets = [0, 0, 0], sizes = [2, 4, 8], strides = [1, 1, 1]} : vector<2x4x16xbf16> to vector<2x4x8xbf16>
    %64 = vector.extract_strided_slice %43 {offsets = [0, 0, 0], sizes = [2, 16, 8], strides = [1, 1, 1]} : vector<2x16x16xbf16> to vector<2x16x8xbf16>
    %65 = vector.extract_strided_slice %45 {offsets = [0, 0, 0], sizes = [2, 16, 8], strides = [1, 1, 1]} : vector<2x16x16xbf16> to vector<2x16x8xbf16>
    "tpu.trace_start"() <{level = 10 : i32, message = "bqd,bnd->bqn"}> : () -> ()
    %cst_39 = arith.constant dense<0.000000e+00> : vector<2x4x16xf32>
    %66 = tpu.matmul %63, %64, %cst_39 {dimension_numbers = #tpu.dot_dimension_numbers<[2], [2], [1], [1], [0, 0, 0, 1, 1, 1], [0], [0]>} : vector<2x4x8xbf16>, vector<2x16x8xbf16>, vector<2x4x16xf32> -> vector<2x4x16xf32>
    "tpu.trace_stop"() : () -> ()
    %67 = vector.broadcast %52 : vector<1x1x16xf32> to vector<2x4x16xf32>
    %68 = arith.mulf %66, %67 : vector<2x4x16xf32>
    %cst_40 = arith.constant dense<0.000000e+00> : vector<2x4xf32>
    %69 = vector.multi_reduction <add>, %68, %cst_40 [2] : vector<2x4x16xf32> to vector<2x4xf32>
    %70 = vector.shape_cast %69 : vector<2x4xf32> to vector<2x4x1xf32>
    %71 = arith.negf %70 : vector<2x4x1xf32>
    %72 = math.exp %71 : vector<2x4x1xf32>
    %cst_41 = arith.constant 1.000000e+00 : f32
    %73 = vector.broadcast %cst_41 : f32 to vector<2x4x1xf32>
    %74 = arith.addf %73, %72 : vector<2x4x1xf32>
    %75 = arith.divf %73, %74 : vector<2x4x1xf32>
    %76 = vector.broadcast %54 : vector<1x1x16xf32> to vector<2x4x16xf32>
    %77 = arith.mulf %66, %76 : vector<2x4x16xf32>
    %cst_42 = arith.constant dense<0.000000e+00> : vector<2x4xf32>
    %78 = vector.multi_reduction <add>, %77, %cst_42 [2] : vector<2x4x16xf32> to vector<2x4xf32>
    %79 = vector.shape_cast %78 : vector<2x4xf32> to vector<2x4x1xf32>
    %cst_43 = arith.constant 0.000000e+00 : f32
    %80 = vector.broadcast %cst_43 : f32 to vector<2x4x1xf32>
    %81 = arith.maximumf %79, %80 : vector<2x4x1xf32>
    %82 = vector.broadcast %cst_43 : f32 to vector<2x4x1xf32>
    %83 = arith.subf %79, %82 : vector<2x4x1xf32>
    %84 = arith.cmpf one, %83, %83 : vector<2x4x1xf32>
    %85 = vector.broadcast %cst_43 : f32 to vector<2x4x1xf32>
    %86 = arith.addf %79, %85 : vector<2x4x1xf32>
    %87 = math.absf %83 : vector<2x4x1xf32>
    %cst_44 = arith.constant 0.000000e+00 : f32
    %88 = vector.broadcast %cst_44 : f32 to vector<2x4x1xf32>
    %89 = arith.subf %88, %87 : vector<2x4x1xf32>
    %90 = math.exp %89 : vector<2x4x1xf32>
    %91 = math.log1p %90 : vector<2x4x1xf32>
    %92 = arith.addf %81, %91 : vector<2x4x1xf32>
    %93 = arith.select %84, %86, %92 : vector<2x4x1xi1>, vector<2x4x1xf32>
    %cst_45 = arith.constant 9.99999997E-7 : f32
    %94 = vector.broadcast %cst_45 : f32 to vector<2x4x1xf32>
    %95 = arith.maximumf %93, %94 : vector<2x4x1xf32>
    %cst_46 = arith.constant 1.000000e+00 : f32
    %96 = vector.broadcast %cst_46 : f32 to vector<2x4x1xf32>
    %97 = arith.divf %95, %96 : vector<2x4x1xf32>
    %cst_47 = arith.constant 1.000000e+00 : f32
    %98 = vector.broadcast %cst_47 : f32 to vector<2x4x1xf32>
    %99 = arith.divf %95, %98 : vector<2x4x1xf32>
    %100 = math.log %99 : vector<2x4x1xf32>
    %101 = arith.subf %97, %100 : vector<2x4x1xf32>
    %cst_48 = arith.constant 1.000000e+00 : f32
    %102 = vector.broadcast %cst_48 : f32 to vector<2x4x1xf32>
    %103 = arith.subf %101, %102 : vector<2x4x1xf32>
    %cst_49 = arith.constant 0.000000e+00 : f32
    %104 = vector.broadcast %cst_49 : f32 to vector<2x4x1xf32>
    %105 = arith.subf %75, %104 : vector<2x4x1xf32>
    %106 = arith.mulf %105, %105 : vector<2x4x1xf32>
    %cst_50 = arith.constant 1.000000e+00 : f32
    %107 = vector.broadcast %cst_50 : f32 to vector<2x4x1xf32>
    %108 = arith.divf %106, %107 : vector<2x4x1xf32>
    %109 = arith.addf %103, %108 : vector<2x4x1xf32>
    %cst_51 = arith.constant 5.000000e-01 : f32
    %110 = vector.broadcast %cst_51 : f32 to vector<2x4x1xf32>
    %111 = arith.mulf %110, %109 : vector<2x4x1xf32>
    %112 = vector.shape_cast %111 : vector<2x4x1xf32> to vector<2x4xf32>
    %113 = vector.broadcast %60 : vector<1x1x16xf32> to vector<2x4x16xf32>
    %114 = vector.broadcast %95 : vector<2x4x1xf32> to vector<2x4x16xf32>
    %115 = arith.addf %113, %114 : vector<2x4x16xf32>
    %116 = math.rsqrt %115 : vector<2x4x16xf32>
    %117 = vector.broadcast %75 : vector<2x4x1xf32> to vector<2x4x16xf32>
    %118 = vector.broadcast %56 : vector<1x1x16xf32> to vector<2x4x16xf32>
    %119 = arith.subf %117, %118 : vector<2x4x16xf32>
    %120 = arith.mulf %119, %116 : vector<2x4x16xf32>
    %cst_52 = arith.constant -5.000000e-01 : f32
    %121 = vector.broadcast %cst_52 : f32 to vector<2x4x16xf32>
    %122 = arith.mulf %121, %120 : vector<2x4x16xf32>
    %123 = arith.mulf %122, %120 : vector<2x4x16xf32>
    %124 = math.exp %123 : vector<2x4x16xf32>
    %cst_53 = arith.constant 0.398942292 : f32
    %125 = vector.broadcast %cst_53 : f32 to vector<2x4x16xf32>
    %126 = arith.mulf %125, %124 : vector<2x4x16xf32>
    %127 = arith.mulf %126, %116 : vector<2x4x16xf32>
    %128 = arith.truncf %127 : vector<2x4x16xf32> to vector<2x4x16xbf16>
    "tpu.trace_start"() <{level = 10 : i32, message = "bqn,bnd->bqd"}> : () -> ()
    %cst_54 = arith.constant dense<0.000000e+00> : vector<2x4x8xf32>
    %129 = tpu.matmul %128, %65, %cst_54 {dimension_numbers = #tpu.dot_dimension_numbers<[2], [1], [1], [2], [0, 0, 0, 1, 1, 2], [0], [0]>} : vector<2x4x16xbf16>, vector<2x16x8xbf16>, vector<2x4x8xf32> -> vector<2x4x8xf32>
    "tpu.trace_stop"() : () -> ()
    %130 = vector.shape_cast %129 : vector<2x4x8xf32> to vector<8x8xf32>
    %131 = arith.truncf %130 : vector<8x8xf32> to vector<8x8xbf16>
    %132 = vector.extract_strided_slice %61 {offsets = [0, 0], sizes = [8, 16], strides = [1, 1]} : vector<16x16xbf16> to vector<8x16xbf16>
    %cst_55 = arith.constant dense<0.000000e+00> : vector<8x16xf32>
    %133 = tpu.matmul %131, %132, %cst_55 {dimension_numbers = #tpu.dot_dimension_numbers<[1], [0], [0], [1], [0, 0, 1, 1], [], []>} : vector<8x8xbf16>, vector<8x16xbf16>, vector<8x16xf32> -> vector<8x16xf32>
    %134 = arith.addf %62, %133 : vector<8x16xf32>
    %135 = vector.extract_strided_slice %50 {offsets = [0, 0, 8], sizes = [2, 4, 8], strides = [1, 1, 1]} : vector<2x4x16xbf16> to vector<2x4x8xbf16>
    %136 = vector.extract_strided_slice %43 {offsets = [0, 0, 8], sizes = [2, 16, 8], strides = [1, 1, 1]} : vector<2x16x16xbf16> to vector<2x16x8xbf16>
    %137 = vector.extract_strided_slice %45 {offsets = [0, 0, 8], sizes = [2, 16, 8], strides = [1, 1, 1]} : vector<2x16x16xbf16> to vector<2x16x8xbf16>
    "tpu.trace_start"() <{level = 10 : i32, message = "bqd,bnd->bqn"}> : () -> ()
    %cst_56 = arith.constant dense<0.000000e+00> : vector<2x4x16xf32>
    %138 = tpu.matmul %135, %136, %cst_56 {dimension_numbers = #tpu.dot_dimension_numbers<[2], [2], [1], [1], [0, 0, 0, 1, 1, 1], [0], [0]>} : vector<2x4x8xbf16>, vector<2x16x8xbf16>, vector<2x4x16xf32> -> vector<2x4x16xf32>
    "tpu.trace_stop"() : () -> ()
    %139 = vector.broadcast %52 : vector<1x1x16xf32> to vector<2x4x16xf32>
    %140 = arith.mulf %138, %139 : vector<2x4x16xf32>
    %cst_57 = arith.constant dense<0.000000e+00> : vector<2x4xf32>
    %141 = vector.multi_reduction <add>, %140, %cst_57 [2] : vector<2x4x16xf32> to vector<2x4xf32>
    %142 = vector.shape_cast %141 : vector<2x4xf32> to vector<2x4x1xf32>
    %143 = arith.negf %142 : vector<2x4x1xf32>
    %144 = math.exp %143 : vector<2x4x1xf32>
    %cst_58 = arith.constant 1.000000e+00 : f32
    %145 = vector.broadcast %cst_58 : f32 to vector<2x4x1xf32>
    %146 = arith.addf %145, %144 : vector<2x4x1xf32>
    %147 = arith.divf %145, %146 : vector<2x4x1xf32>
    %148 = vector.broadcast %54 : vector<1x1x16xf32> to vector<2x4x16xf32>
    %149 = arith.mulf %138, %148 : vector<2x4x16xf32>
    %cst_59 = arith.constant dense<0.000000e+00> : vector<2x4xf32>
    %150 = vector.multi_reduction <add>, %149, %cst_59 [2] : vector<2x4x16xf32> to vector<2x4xf32>
    %151 = vector.shape_cast %150 : vector<2x4xf32> to vector<2x4x1xf32>
    %cst_60 = arith.constant 0.000000e+00 : f32
    %152 = vector.broadcast %cst_60 : f32 to vector<2x4x1xf32>
    %153 = arith.maximumf %151, %152 : vector<2x4x1xf32>
    %154 = vector.broadcast %cst_60 : f32 to vector<2x4x1xf32>
    %155 = arith.subf %151, %154 : vector<2x4x1xf32>
    %156 = arith.cmpf one, %155, %155 : vector<2x4x1xf32>
    %157 = vector.broadcast %cst_60 : f32 to vector<2x4x1xf32>
    %158 = arith.addf %151, %157 : vector<2x4x1xf32>
    %159 = math.absf %155 : vector<2x4x1xf32>
    %cst_61 = arith.constant 0.000000e+00 : f32
    %160 = vector.broadcast %cst_61 : f32 to vector<2x4x1xf32>
    %161 = arith.subf %160, %159 : vector<2x4x1xf32>
    %162 = math.exp %161 : vector<2x4x1xf32>
    %163 = math.log1p %162 : vector<2x4x1xf32>
    %164 = arith.addf %153, %163 : vector<2x4x1xf32>
    %165 = arith.select %156, %158, %164 : vector<2x4x1xi1>, vector<2x4x1xf32>
    %cst_62 = arith.constant 9.99999997E-7 : f32
    %166 = vector.broadcast %cst_62 : f32 to vector<2x4x1xf32>
    %167 = arith.maximumf %165, %166 : vector<2x4x1xf32>
    %cst_63 = arith.constant 1.000000e+00 : f32
    %168 = vector.broadcast %cst_63 : f32 to vector<2x4x1xf32>
    %169 = arith.divf %167, %168 : vector<2x4x1xf32>
    %cst_64 = arith.constant 1.000000e+00 : f32
    %170 = vector.broadcast %cst_64 : f32 to vector<2x4x1xf32>
    %171 = arith.divf %167, %170 : vector<2x4x1xf32>
    %172 = math.log %171 : vector<2x4x1xf32>
    %173 = arith.subf %169, %172 : vector<2x4x1xf32>
    %cst_65 = arith.constant 1.000000e+00 : f32
    %174 = vector.broadcast %cst_65 : f32 to vector<2x4x1xf32>
    %175 = arith.subf %173, %174 : vector<2x4x1xf32>
    %cst_66 = arith.constant 0.000000e+00 : f32
    %176 = vector.broadcast %cst_66 : f32 to vector<2x4x1xf32>
    %177 = arith.subf %147, %176 : vector<2x4x1xf32>
    %178 = arith.mulf %177, %177 : vector<2x4x1xf32>
    %cst_67 = arith.constant 1.000000e+00 : f32
    %179 = vector.broadcast %cst_67 : f32 to vector<2x4x1xf32>
    %180 = arith.divf %178, %179 : vector<2x4x1xf32>
    %181 = arith.addf %175, %180 : vector<2x4x1xf32>
    %cst_68 = arith.constant 5.000000e-01 : f32
    %182 = vector.broadcast %cst_68 : f32 to vector<2x4x1xf32>
    %183 = arith.mulf %182, %181 : vector<2x4x1xf32>
    %184 = vector.shape_cast %183 : vector<2x4x1xf32> to vector<2x4xf32>
    %185 = vector.broadcast %60 : vector<1x1x16xf32> to vector<2x4x16xf32>
    %186 = vector.broadcast %167 : vector<2x4x1xf32> to vector<2x4x16xf32>
    %187 = arith.addf %185, %186 : vector<2x4x16xf32>
    %188 = math.rsqrt %187 : vector<2x4x16xf32>
    %189 = vector.broadcast %147 : vector<2x4x1xf32> to vector<2x4x16xf32>
    %190 = vector.broadcast %56 : vector<1x1x16xf32> to vector<2x4x16xf32>
    %191 = arith.subf %189, %190 : vector<2x4x16xf32>
    %192 = arith.mulf %191, %188 : vector<2x4x16xf32>
    %cst_69 = arith.constant -5.000000e-01 : f32
    %193 = vector.broadcast %cst_69 : f32 to vector<2x4x16xf32>
    %194 = arith.mulf %193, %192 : vector<2x4x16xf32>
    %195 = arith.mulf %194, %192 : vector<2x4x16xf32>
    %196 = math.exp %195 : vector<2x4x16xf32>
    %cst_70 = arith.constant 0.398942292 : f32
    %197 = vector.broadcast %cst_70 : f32 to vector<2x4x16xf32>
    %198 = arith.mulf %197, %196 : vector<2x4x16xf32>
    %199 = arith.mulf %198, %188 : vector<2x4x16xf32>
    %200 = arith.truncf %199 : vector<2x4x16xf32> to vector<2x4x16xbf16>
    "tpu.trace_start"() <{level = 10 : i32, message = "bqn,bnd->bqd"}> : () -> ()
    %cst_71 = arith.constant dense<0.000000e+00> : vector<2x4x8xf32>
    %201 = tpu.matmul %200, %137, %cst_71 {dimension_numbers = #tpu.dot_dimension_numbers<[2], [1], [1], [2], [0, 0, 0, 1, 1, 2], [0], [0]>} : vector<2x4x16xbf16>, vector<2x16x8xbf16>, vector<2x4x8xf32> -> vector<2x4x8xf32>
    "tpu.trace_stop"() : () -> ()
    %202 = vector.shape_cast %201 : vector<2x4x8xf32> to vector<8x8xf32>
    %203 = arith.truncf %202 : vector<8x8xf32> to vector<8x8xbf16>
    %204 = vector.extract_strided_slice %61 {offsets = [8, 0], sizes = [8, 16], strides = [1, 1]} : vector<16x16xbf16> to vector<8x16xbf16>
    %cst_72 = arith.constant dense<0.000000e+00> : vector<8x16xf32>
    %205 = tpu.matmul %203, %204, %cst_72 {dimension_numbers = #tpu.dot_dimension_numbers<[1], [0], [0], [1], [0, 0, 1, 1], [], []>} : vector<8x8xbf16>, vector<8x16xbf16>, vector<8x16xf32> -> vector<8x16xf32>
    %206 = arith.addf %134, %205 : vector<8x16xf32>
    %207 = vector.shape_cast %206 : vector<8x16xf32> to vector<2x4x16xf32>
    %c0_73 = arith.constant 0 : index
    %c0_74 = arith.constant 0 : index
    %c0_75 = arith.constant 0 : index
    %c0_76 = arith.constant 0 : index
    %208 = vector.load %arg12[%c0_73, %c0_74, %c0_75, %c0_76] : memref<1x2x4x16xf32, #tpu.memory_space<vmem>>, vector<1x2x4x16xf32>
    %209 = vector.shape_cast %208 : vector<1x2x4x16xf32> to vector<2x4x16xf32>
    %210 = vector.shape_cast %207 : vector<2x4x16xf32> to vector<1x2x4x16xf32>
    tpu.vector_store %arg12[%c0_73, %c0_74, %c0_75, %c0_76], %210 {strides = array<i32>} : memref<1x2x4x16xf32, #tpu.memory_space<vmem>>, vector<1x2x4x16xf32>,
    %211 = vector.shape_cast %112 : vector<2x4xf32> to vector<2x1x4xf32>
    %212 = vector.shape_cast %184 : vector<2x4xf32> to vector<2x1x4xf32>
    %213 = tpu.concatenate %211, %212 in 1 : vector<2x1x4xf32>, vector<2x1x4xf32> -> vector<2x2x4xf32>
    %c0_77 = arith.constant 0 : index
    %c0_78 = arith.constant 0 : index
    %c0_79 = arith.constant 0 : index
    %c0_80 = arith.constant 0 : index
    %214 = vector.load %arg13[%c0_77, %c0_78, %c0_79, %c0_80] : memref<1x2x2x4xf32, #tpu.memory_space<vmem>>, vector<1x2x2x4xf32>
    %215 = vector.shape_cast %214 : vector<1x2x2x4xf32> to vector<2x2x4xf32>
    %216 = vector.shape_cast %213 : vector<2x2x4xf32> to vector<1x2x2x4xf32>
    tpu.vector_store %arg13[%c0_77, %c0_78, %c0_79, %c0_80], %216 {strides = array<i32>} : memref<1x2x2x4xf32, #tpu.memory_space<vmem>>, vector<1x2x2x4xf32>,
    return
  }
  func.func @transform_0(%arg0: i32) -> (i32, i32, i32) {
    %c0_i32 = arith.constant 0 : i32
    %c0_i32_0 = arith.constant 0 : i32
    %c0_i32_1 = arith.constant 0 : i32
    %c0_i32_2 = arith.constant 0 : i32
    return %c0_i32, %c0_i32_0, %c0_i32_1 : i32, i32, i32
  }
  func.func @transform_1(%arg0: i32) -> (i32, i32, i32, i32) {
    %c0_i32 = arith.constant 0 : i32
    %c0_i32_0 = arith.constant 0 : i32
    %c0_i32_1 = arith.constant 0 : i32
    %c0_i32_2 = arith.constant 0 : i32
    return %arg0, %c0_i32, %c0_i32_0, %c0_i32_1 : i32, i32, i32, i32
  }
  func.func @transform_2(%arg0: i32) -> (i32, i32, i32) {
    %c0_i32 = arith.constant 0 : i32
    %c0_i32_0 = arith.constant 0 : i32
    %c0_i32_1 = arith.constant 0 : i32
    %c0_i32_2 = arith.constant 0 : i32
    return %c0_i32, %c0_i32_0, %c0_i32_1 : i32, i32, i32
  }
  func.func @transform_3(%arg0: i32) -> (i32, i32) {
    %c0_i32 = arith.constant 0 : i32
    %c0_i32_0 = arith.constant 0 : i32
    %c0_i32_1 = arith.constant 0 : i32
    return %c0_i32, %c0_i32_0 : i32, i32
  }
  func.func @transform_4(%arg0: i32) -> (i32, i32) {
    %c0_i32 = arith.constant 0 : i32
    %c0_i32_0 = arith.constant 0 : i32
    %c0_i32_1 = arith.constant 0 : i32
    return %c0_i32, %c0_i32_0 : i32, i32
  }
  func.func @transform_5(%arg0: i32) -> (i32, i32) {
    %c0_i32 = arith.constant 0 : i32
    %c0_i32_0 = arith.constant 0 : i32
    %c0_i32_1 = arith.constant 0 : i32
    return %c0_i32, %c0_i32_0 : i32, i32
  }
  func.func @transform_6(%arg0: i32) -> (i32, i32) {
    %c0_i32 = arith.constant 0 : i32
    %c0_i32_0 = arith.constant 0 : i32
    %c0_i32_1 = arith.constant 0 : i32
    return %c0_i32, %c0_i32_0 : i32, i32
  }
  func.func @transform_7(%arg0: i32) -> (i32, i32) {
    %c0_i32 = arith.constant 0 : i32
    %c0_i32_0 = arith.constant 0 : i32
    %c0_i32_1 = arith.constant 0 : i32
    return %c0_i32, %c0_i32_0 : i32, i32
  }
  func.func @transform_8(%arg0: i32) -> (i32, i32) {
    %c0_i32 = arith.constant 0 : i32
    %c0_i32_0 = arith.constant 0 : i32
    %c0_i32_1 = arith.constant 0 : i32
    return %c0_i32, %c0_i32_0 : i32, i32
  }
  func.func @transform_9(%arg0: i32) -> (i32, i32) {
    %c0_i32 = arith.constant 0 : i32
    %c0_i32_0 = arith.constant 0 : i32
    %c0_i32_1 = arith.constant 0 : i32
    return %c0_i32, %c0_i32_0 : i32, i32
  }
  func.func @transform_10(%arg0: i32) -> (i32, i32) {
    %c0_i32 = arith.constant 0 : i32
    %c0_i32_0 = arith.constant 0 : i32
    %c0_i32_1 = arith.constant 0 : i32
    return %c0_i32, %c0_i32_0 : i32, i32
  }
  func.func @transform_11(%arg0: i32) -> (i32, i32, i32, i32) {
    %c0_i32 = arith.constant 0 : i32
    %c0_i32_0 = arith.constant 0 : i32
    %c0_i32_1 = arith.constant 0 : i32
    %c0_i32_2 = arith.constant 0 : i32
    return %arg0, %c0_i32, %c0_i32_0, %c0_i32_1 : i32, i32, i32, i32
  }
  func.func @transform_12(%arg0: i32) -> (i32, i32, i32, i32) {
    %c0_i32 = arith.constant 0 : i32
    %c0_i32_0 = arith.constant 0 : i32
    %c0_i32_1 = arith.constant 0 : i32
    %c0_i32_2 = arith.constant 0 : i32
    return %arg0, %c0_i32, %c0_i32_0, %c0_i32_1 : i32, i32, i32, i32
  }
}

</mosaic_0001>

<llo_original>
// kernel: long_term_attention_forward.1
$region0: #{long_term_attention_forward.1}
  #allocation0 [shape = 'u32[]', space=smem, size = 0x4, offset = 0x4, fixed_abs, tag = 'smem constant byte address 0x4 - core index']
  #allocation1 [shape = 'u32[72,128]{1,0:T(1,128)}', space=vmem, size = 0x9000, scoped, tag = 'internal scratch']
  %s0 = inlined_call_operand.vmem [shape: f32[2,10,16], index: 0, kind: input, shape index: {}]
  %s1 = inlined_call_operand.vmem [shape: f32[2,2,4,16], index: 1, kind: input, shape index: {}]
  %s2 = inlined_call_operand.vmem [shape: bf16[3,16,16], index: 2, kind: input, shape index: {}]
  %s3 = inlined_call_operand.vmem [shape: f32[1,16], index: 3, kind: input, shape index: {}]
  %s4 = inlined_call_operand.vmem [shape: f32[16,8], index: 4, kind: input, shape index: {}]
  %s5 = inlined_call_operand.vmem [shape: bf16[16,32], index: 5, kind: input, shape index: {}]
  %s6 = inlined_call_operand.vmem [shape: f32[1,16], index: 6, kind: input, shape index: {}]
  %s7 = inlined_call_operand.vmem [shape: f32[1,16], index: 7, kind: input, shape index: {}]
  %s8 = inlined_call_operand.vmem [shape: f32[1,16], index: 8, kind: input, shape index: {}]
  %s9 = inlined_call_operand.vmem [shape: f32[1,16], index: 9, kind: input, shape index: {}]
  %s10 = inlined_call_operand.vmem [shape: bf16[16,16], index: 10, kind: input, shape index: {}]
  %s11 = inlined_call_operand.vmem [shape: f32[2,2,4,16], index: 11, kind: output, shape index: {0}]
  %s12 = inlined_call_operand.vmem [shape: f32[2,2,2,4], index: 12, kind: output, shape index: {1}]
  %13 = xla_tuple %s11, %s12
  %s14 = sld [smem:[#allocation0]]
  $region85: #{long_term_attention_forward.1} parent=0
    _
  %s16 = ssub.s32 1, %s14
  %s17 = scalar_select 0, %s16, %s14
  loop: start=0, step=1, limit=4
  $region2: #{long_term_attention_forward.1} parent=0 // loop_pre_header
    _
  $region3: #{long_term_attention_forward.1} parent=0 // loop_header
    %s19 = sphi 0, %s23
    %p20 = scmp.ge.s32.totalorder %s19, 4
    %s27 = sphi 0, %s27
    %s29 = sphi 0, %s27
    %s30 = sphi 0, %s29
    %s44 = sphi 0, %s30
    %s50 = sphi 0, %s52
    %s53 = sphi 0, %s50
    %s54 = sphi 0, %s53
    %s70 = sphi 0, %s54
    %s74 = sphi 0, %s74
    %s76 = sphi 0, %s74
    %s77 = sphi 0, %s76
    %s91 = sphi 0, %s77
    %s95 = sphi 0, %s95
    %s97 = sphi 0, %s95
    %s98 = sphi 0, %s97
    %s112 = sphi 0, %s98
    %s116 = sphi 0, %s116
    %s118 = sphi 0, %s116
    %s119 = sphi 0, %s118
    %s133 = sphi 0, %s119
    %s137 = sphi 0, %s137
    %s139 = sphi 0, %s137
    %s140 = sphi 0, %s139
    %s154 = sphi 0, %s140
    %s158 = sphi 0, %s158
    %s160 = sphi 0, %s158
    %s161 = sphi 0, %s160
    %s175 = sphi 0, %s161
    %s179 = sphi 0, %s179
    %s181 = sphi 0, %s179
    %s182 = sphi 0, %s181
    %s196 = sphi 0, %s182
    %s200 = sphi 0, %s200
    %s202 = sphi 0, %s200
    %s203 = sphi 0, %s202
    %s217 = sphi 0, %s203
    %s221 = sphi 0, %s221
    %s223 = sphi 0, %s221
    %s224 = sphi 0, %s223
    %s238 = sphi 0, %s224
    %s242 = sphi 0, %s242
    %s244 = sphi 0, %s242
    %s245 = sphi 0, %s244
    %s259 = sphi 0, %s245
    %s265 = sphi 0, %s267
    %s268 = sphi 0, %s265
    %s269 = sphi 0, %s268
    %s285 = sphi 0, %s269
    %s291 = sphi 0, %s293
    %s294 = sphi 0, %s291
    %s295 = sphi 0, %s294
    %s311 = sphi 0, %s295
  $region4: #{long_term_attention_forward.1} parent=0 // loop_header_branch
    %22 = sbr.rel (%p20) target = $region8
  $region5: #{long_term_attention_forward.1} parent=0 // loop_body
    %s24 = ssub.s32 %s19, 1
    %s25 = ssub.s32 %s19, 2
    %s26 = sadd.s32 %s19, 1
    %s28 = sadd.s32 %s27, 1
    %p31 = scmp.eq.s32.totalorder %s19, 1
    %p32 = scmp.ne.s32.totalorder %s27, %s29
    %p33 = scmp.eq.s32.totalorder %s19, 0
    %p34 = por %p32, %p33
    %p35 = scmp.ne.s32.totalorder %s27, %s29
    %p36 = scmp.eq.s32.totalorder %s24, 1
    %p37 = por %p35, %p36
    %p38 = scmp.ne.s32.totalorder %s29, %s30
    %p39 = scmp.eq.s32.totalorder %s24, 0
    %p40 = por %p38, %p39
    %p41 = scmp.ne.s32.totalorder %s29, %s30
    %p42 = scmp.eq.s32.totalorder %s25, 1
    %p43 = por %p41, %p42
    %p45 = scmp.ne.s32.totalorder %s30, %s44
    %p46 = scmp.eq.s32.totalorder %s25, 0
    %p47 = por %p45, %p46
    %s48 = ssub.s32 %s19, %s26
    %p49 = scmp.eq.s32.totalorder %s48, 0
    %s51 = sadd.s32 %s50, 1
    %s52 = scalar_select %p49, %s50, %s51
    %p55 = pneg %p49
    %p56 = scmp.eq.s32.totalorder %s19, 1
    %p57 = por %p55, %p56
    %p58 = scmp.ne.s32.totalorder %s50, %s53
    %p59 = scmp.eq.s32.totalorder %s19, 0
    %p60 = por %p58, %p59
    %p61 = scmp.ne.s32.totalorder %s50, %s53
    %p62 = scmp.eq.s32.totalorder %s24, 1
    %p63 = por %p61, %p62
    %p64 = scmp.ne.s32.totalorder %s53, %s54
    %p65 = scmp.eq.s32.totalorder %s24, 0
    %p66 = por %p64, %p65
    %p67 = scmp.ne.s32.totalorder %s53, %s54
    %p68 = scmp.eq.s32.totalorder %s25, 1
    %p69 = por %p67, %p68
    %p71 = scmp.ne.s32.totalorder %s54, %s70
    %p72 = scmp.eq.s32.totalorder %s25, 0
    %p73 = por %p71, %p72
    %s75 = sadd.s32 %s74, 1
    %p78 = scmp.eq.s32.totalorder %s19, 1
    %p79 = scmp.ne.s32.totalorder %s74, %s76
    %p80 = scmp.eq.s32.totalorder %s19, 0
    %p81 = por %p79, %p80
    %p82 = scmp.ne.s32.totalorder %s74, %s76
    %p83 = scmp.eq.s32.totalorder %s24, 1
    %p84 = por %p82, %p83
    %p85 = scmp.ne.s32.totalorder %s76, %s77
    %p86 = scmp.eq.s32.totalorder %s24, 0
    %p87 = por %p85, %p86
    %p88 = scmp.ne.s32.totalorder %s76, %s77
    %p89 = scmp.eq.s32.totalorder %s25, 1
    %p90 = por %p88, %p89
    %p92 = scmp.ne.s32.totalorder %s77, %s91
    %p93 = scmp.eq.s32.totalorder %s25, 0
    %p94 = por %p92, %p93
    %s96 = sadd.s32 %s95, 1
    %p99 = scmp.eq.s32.totalorder %s19, 1
    %p100 = scmp.ne.s32.totalorder %s95, %s97
    %p101 = scmp.eq.s32.totalorder %s19, 0
    %p102 = por %p100, %p101
    %p103 = scmp.ne.s32.totalorder %s95, %s97
    %p104 = scmp.eq.s32.totalorder %s24, 1
    %p105 = por %p103, %p104
    %p106 = scmp.ne.s32.totalorder %s97, %s98
    %p107 = scmp.eq.s32.totalorder %s24, 0
    %p108 = por %p106, %p107
    %p109 = scmp.ne.s32.totalorder %s97, %s98
    %p110 = scmp.eq.s32.totalorder %s25, 1
    %p111 = por %p109, %p110
    %p113 = scmp.ne.s32.totalorder %s98, %s112
    %p114 = scmp.eq.s32.totalorder %s25, 0
    %p115 = por %p113, %p114
    %s117 = sadd.s32 %s116, 1
    %p120 = scmp.eq.s32.totalorder %s19, 1
    %p121 = scmp.ne.s32.totalorder %s116, %s118
    %p122 = scmp.eq.s32.totalorder %s19, 0
    %p123 = por %p121, %p122
    %p124 = scmp.ne.s32.totalorder %s116, %s118
    %p125 = scmp.eq.s32.totalorder %s24, 1
    %p126 = por %p124, %p125
    %p127 = scmp.ne.s32.totalorder %s118, %s119
    %p128 = scmp.eq.s32.totalorder %s24, 0
    %p129 = por %p127, %p128
    %p130 = scmp.ne.s32.totalorder %s118, %s119
    %p131 = scmp.eq.s32.totalorder %s25, 1
    %p132 = por %p130, %p131
    %p134 = scmp.ne.s32.totalorder %s119, %s133
    %p135 = scmp.eq.s32.totalorder %s25, 0
    %p136 = por %p134, %p135
    %s138 = sadd.s32 %s137, 1
    %p141 = scmp.eq.s32.totalorder %s19, 1
    %p142 = scmp.ne.s32.totalorder %s137, %s139
    %p143 = scmp.eq.s32.totalorder %s19, 0
    %p144 = por %p142, %p143
    %p145 = scmp.ne.s32.totalorder %s137, %s139
    %p146 = scmp.eq.s32.totalorder %s24, 1
    %p147 = por %p145, %p146
    %p148 = scmp.ne.s32.totalorder %s139, %s140
    %p149 = scmp.eq.s32.totalorder %s24, 0
    %p150 = por %p148, %p149
    %p151 = scmp.ne.s32.totalorder %s139, %s140
    %p152 = scmp.eq.s32.totalorder %s25, 1
    %p153 = por %p151, %p152
    %p155 = scmp.ne.s32.totalorder %s140, %s154
    %p156 = scmp.eq.s32.totalorder %s25, 0
    %p157 = por %p155, %p156
    %s159 = sadd.s32 %s158, 1
    %p162 = scmp.eq.s32.totalorder %s19, 1
    %p163 = scmp.ne.s32.totalorder %s158, %s160
    %p164 = scmp.eq.s32.totalorder %s19, 0
    %p165 = por %p163, %p164
    %p166 = scmp.ne.s32.totalorder %s158, %s160
    %p167 = scmp.eq.s32.totalorder %s24, 1
    %p168 = por %p166, %p167
    %p169 = scmp.ne.s32.totalorder %s160, %s161
    %p170 = scmp.eq.s32.totalorder %s24, 0
    %p171 = por %p169, %p170
    %p172 = scmp.ne.s32.totalorder %s160, %s161
    %p173 = scmp.eq.s32.totalorder %s25, 1
    %p174 = por %p172, %p173
    %p176 = scmp.ne.s32.totalorder %s161, %s175
    %p177 = scmp.eq.s32.totalorder %s25, 0
    %p178 = por %p176, %p177
    %s180 = sadd.s32 %s179, 1
    %p183 = scmp.eq.s32.totalorder %s19, 1
    %p184 = scmp.ne.s32.totalorder %s179, %s181
    %p185 = scmp.eq.s32.totalorder %s19, 0
    %p186 = por %p184, %p185
    %p187 = scmp.ne.s32.totalorder %s179, %s181
    %p188 = scmp.eq.s32.totalorder %s24, 1
    %p189 = por %p187, %p188
    %p190 = scmp.ne.s32.totalorder %s181, %s182
    %p191 = scmp.eq.s32.totalorder %s24, 0
    %p192 = por %p190, %p191
    %p193 = scmp.ne.s32.totalorder %s181, %s182
    %p194 = scmp.eq.s32.totalorder %s25, 1
    %p195 = por %p193, %p194
    %p197 = scmp.ne.s32.totalorder %s182, %s196
    %p198 = scmp.eq.s32.totalorder %s25, 0
    %p199 = por %p197, %p198
    %s201 = sadd.s32 %s200, 1
    %p204 = scmp.eq.s32.totalorder %s19, 1
    %p205 = scmp.ne.s32.totalorder %s200, %s202
    %p206 = scmp.eq.s32.totalorder %s19, 0
    %p207 = por %p205, %p206
    %p208 = scmp.ne.s32.totalorder %s200, %s202
    %p209 = scmp.eq.s32.totalorder %s24, 1
    %p210 = por %p208, %p209
    %p211 = scmp.ne.s32.totalorder %s202, %s203
    %p212 = scmp.eq.s32.totalorder %s24, 0
    %p213 = por %p211, %p212
    %p214 = scmp.ne.s32.totalorder %s202, %s203
    %p215 = scmp.eq.s32.totalorder %s25, 1
    %p216 = por %p214, %p215
    %p218 = scmp.ne.s32.totalorder %s203, %s217
    %p219 = scmp.eq.s32.totalorder %s25, 0
    %p220 = por %p218, %p219
    %s222 = sadd.s32 %s221, 1
    %p225 = scmp.eq.s32.totalorder %s19, 1
    %p226 = scmp.ne.s32.totalorder %s221, %s223
    %p227 = scmp.eq.s32.totalorder %s19, 0
    %p228 = por %p226, %p227
    %p229 = scmp.ne.s32.totalorder %s221, %s223
    %p230 = scmp.eq.s32.totalorder %s24, 1
    %p231 = por %p229, %p230
    %p232 = scmp.ne.s32.totalorder %s223, %s224
    %p233 = scmp.eq.s32.totalorder %s24, 0
    %p234 = por %p232, %p233
    %p235 = scmp.ne.s32.totalorder %s223, %s224
    %p236 = scmp.eq.s32.totalorder %s25, 1
    %p237 = por %p235, %p236
    %p239 = scmp.ne.s32.totalorder %s224, %s238
    %p240 = scmp.eq.s32.totalorder %s25, 0
    %p241 = por %p239, %p240
    %s243 = sadd.s32 %s242, 1
    %p246 = scmp.eq.s32.totalorder %s19, 1
    %p247 = scmp.ne.s32.totalorder %s242, %s244
    %p248 = scmp.eq.s32.totalorder %s19, 0
    %p249 = por %p247, %p248
    %p250 = scmp.ne.s32.totalorder %s242, %s244
    %p251 = scmp.eq.s32.totalorder %s24, 1
    %p252 = por %p250, %p251
    %p253 = scmp.ne.s32.totalorder %s244, %s245
    %p254 = scmp.eq.s32.totalorder %s24, 0
    %p255 = por %p253, %p254
    %p256 = scmp.ne.s32.totalorder %s244, %s245
    %p257 = scmp.eq.s32.totalorder %s25, 1
    %p258 = por %p256, %p257
    %p260 = scmp.ne.s32.totalorder %s245, %s259
    %p261 = scmp.eq.s32.totalorder %s25, 0
    %p262 = por %p260, %p261
    %s263 = ssub.s32 %s19, %s26
    %p264 = scmp.eq.s32.totalorder %s263, 0
    %s266 = sadd.s32 %s265, 1
    %s267 = scalar_select %p264, %s265, %s266
    %p270 = pneg %p264
    %p271 = scmp.eq.s32.totalorder %s19, 1
    %p272 = por %p270, %p271
    %p273 = scmp.ne.s32.totalorder %s265, %s268
    %p274 = scmp.eq.s32.totalorder %s19, 0
    %p275 = por %p273, %p274
    %p276 = scmp.ne.s32.totalorder %s265, %s268
    %p277 = scmp.eq.s32.totalorder %s24, 1
    %p278 = por %p276, %p277
    %p279 = scmp.ne.s32.totalorder %s268, %s269
    %p280 = scmp.eq.s32.totalorder %s24, 0
    %p281 = por %p279, %p280
    %p282 = scmp.ne.s32.totalorder %s268, %s269
    %p283 = scmp.eq.s32.totalorder %s25, 1
    %p284 = por %p282, %p283
    %p286 = scmp.ne.s32.totalorder %s269, %s285
    %p287 = scmp.eq.s32.totalorder %s25, 0
    %p288 = por %p286, %p287
    %s289 = ssub.s32 %s19, %s26
    %p290 = scmp.eq.s32.totalorder %s289, 0
    %s292 = sadd.s32 %s291, 1
    %s293 = scalar_select %p290, %s291, %s292
    %p296 = pneg %p290
    %p297 = scmp.eq.s32.totalorder %s19, 1
    %p298 = por %p296, %p297
    %p299 = scmp.ne.s32.totalorder %s291, %s294
    %p300 = scmp.eq.s32.totalorder %s19, 0
    %p301 = por %p299, %p300
    %p302 = scmp.ne.s32.totalorder %s291, %s294
    %p303 = scmp.eq.s32.totalorder %s24, 1
    %p304 = por %p302, %p303
    %p305 = scmp.ne.s32.totalorder %s294, %s295
    %p306 = scmp.eq.s32.totalorder %s24, 0
    %p307 = por %p305, %p306
    %p308 = scmp.ne.s32.totalorder %s294, %s295
    %p309 = scmp.eq.s32.totalorder %s25, 1
    %p310 = por %p308, %p309
    %p312 = scmp.ne.s32.totalorder %s295, %s311
    %p313 = scmp.eq.s32.totalorder %s25, 0
    %p314 = por %p312, %p313
    %p315 = scmp.le.s32.totalorder 1, %s19
    %p316 = scmp.lt.s32.totalorder %s19, 3
    %p317 = pnand %p315, %p316
    %p318 = pneg %p317
    // Predicated region
    $region9: #{long_term_attention_forward.1} parent=5 // pred_check
      _
    $region10: #{long_term_attention_forward.1} parent=5 // pred_check_branch
      %320 = sbr.rel (%p317) target = $region12
    $region11: #{long_term_attention_forward.1} parent=5 // pred_region
      %s321 = ssub.s32 %s19, 1
      // Predicated region
      $region13: #{long_term_attention_forward.1} parent=11 // pred_check
        %p322 = pneg %p40
      $region14: #{long_term_attention_forward.1} parent=11 // pred_check_branch
        %324 = sbr.rel (%p322) target = $region16
      $region15: #{long_term_attention_forward.1} parent=11 // pred_region
        _
      $region16: #{long_term_attention_forward.1} parent=11 // pred_fallthru
        _
      // Predicated region
      $region17: #{long_term_attention_forward.1} parent=11 // pred_check
        %p325 = pneg %p87
      $region18: #{long_term_attention_forward.1} parent=11 // pred_check_branch
        %327 = sbr.rel (%p325) target = $region20
      $region19: #{long_term_attention_forward.1} parent=11 // pred_region
        _
      $region20: #{long_term_attention_forward.1} parent=11 // pred_fallthru
        _
      // Predicated region
      $region21: #{long_term_attention_forward.1} parent=11 // pred_check
        %p328 = pneg %p108
      $region22: #{long_term_attention_forward.1} parent=11 // pred_check_branch
        %330 = sbr.rel (%p328) target = $region24
      $region23: #{long_term_attention_forward.1} parent=11 // pred_region
        _
      $region24: #{long_term_attention_forward.1} parent=11 // pred_fallthru
        _
      // Predicated region
      $region25: #{long_term_attention_forward.1} parent=11 // pred_check
        %p331 = pneg %p129
      $region26: #{long_term_attention_forward.1} parent=11 // pred_check_branch
        %333 = sbr.rel (%p331) target = $region28
      $region27: #{long_term_attention_forward.1} parent=11 // pred_region
        _
      $region28: #{long_term_attention_forward.1} parent=11 // pred_fallthru
        _
      // Predicated region
      $region29: #{long_term_attention_forward.1} parent=11 // pred_check
        %p334 = pneg %p150
      $region30: #{long_term_attention_forward.1} parent=11 // pred_check_branch
        %336 = sbr.rel (%p334) target = $region32
      $region31: #{long_term_attention_forward.1} parent=11 // pred_region
        _
      $region32: #{long_term_attention_forward.1} parent=11 // pred_fallthru
        _
      // Predicated region
      $region33: #{long_term_attention_forward.1} parent=11 // pred_check
        %p337 = pneg %p171
      $region34: #{long_term_attention_forward.1} parent=11 // pred_check_branch
        %339 = sbr.rel (%p337) target = $region36
      $region35: #{long_term_attention_forward.1} parent=11 // pred_region
        _
      $region36: #{long_term_attention_forward.1} parent=11 // pred_fallthru
        _
      // Predicated region
      $region37: #{long_term_attention_forward.1} parent=11 // pred_check
        %p340 = pneg %p192
      $region38: #{long_term_attention_forward.1} parent=11 // pred_check_branch
        %342 = sbr.rel (%p340) target = $region40
      $region39: #{long_term_attention_forward.1} parent=11 // pred_region
        _
      $region40: #{long_term_attention_forward.1} parent=11 // pred_fallthru
        _
      // Predicated region
      $region41: #{long_term_attention_forward.1} parent=11 // pred_check
        %p343 = pneg %p213
      $region42: #{long_term_attention_forward.1} parent=11 // pred_check_branch
        %345 = sbr.rel (%p343) target = $region44
      $region43: #{long_term_attention_forward.1} parent=11 // pred_region
        _
      $region44: #{long_term_attention_forward.1} parent=11 // pred_fallthru
        _
      // Predicated region
      $region45: #{long_term_attention_forward.1} parent=11 // pred_check
        %p346 = pneg %p234
      $region46: #{long_term_attention_forward.1} parent=11 // pred_check_branch
        %348 = sbr.rel (%p346) target = $region48
      $region47: #{long_term_attention_forward.1} parent=11 // pred_region
        _
      $region48: #{long_term_attention_forward.1} parent=11 // pred_fallthru
        _
      // Predicated region
      $region49: #{long_term_attention_forward.1} parent=11 // pred_check
        %p349 = pneg %p255
      $region50: #{long_term_attention_forward.1} parent=11 // pred_check_branch
        %351 = sbr.rel (%p349) target = $region52
      $region51: #{long_term_attention_forward.1} parent=11 // pred_region
        _
      $region52: #{long_term_attention_forward.1} parent=11 // pred_fallthru
        _
    $region12: #{long_term_attention_forward.1} parent=5 // pred_fallthru
      _
    %p352 = scmp.lt.s32.totalorder %s19, 2
    // Predicated region
    $region53: #{long_term_attention_forward.1} parent=5 // pred_check
      %p353 = pneg %p352
    $region54: #{long_term_attention_forward.1} parent=5 // pred_check_branch
      %355 = sbr.rel (%p353) target = $region56
    $region55: #{long_term_attention_forward.1} parent=5 // pred_region
      // Predicated region
      $region57: #{long_term_attention_forward.1} parent=55 // pred_check
        %p356 = pneg %p60
      $region58: #{long_term_attention_forward.1} parent=55 // pred_check_branch
        %358 = sbr.rel (%p356) target = $region60
      $region59: #{long_term_attention_forward.1} parent=55 // pred_region
        %p359 = scmp.lt.s32.totalorder %s19, 1
        %s360 = scalar_select %p359, %s19, 1
        %s361 = smul.addr %s360, 2
        %s362 = smul.addr %s361, 4
        %s363 = scalar_lea.vmem %s1, %s362
      $region60: #{long_term_attention_forward.1} parent=55 // pred_fallthru
        _
    $region56: #{long_term_attention_forward.1} parent=5 // pred_fallthru
      _
    %p364 = scmp.le.s32.totalorder 1, %s19
    %p365 = scmp.lt.s32.totalorder %s19, 3
    %p366 = pnand %p364, %p365
    %p367 = pneg %p366
    // Predicated region
    $region61: #{long_term_attention_forward.1} parent=5 // pred_check
      _
    $region62: #{long_term_attention_forward.1} parent=5 // pred_check_branch
      %369 = sbr.rel (%p366) target = $region64
    $region63: #{long_term_attention_forward.1} parent=5 // pred_region
      %s370 = ssub.s32 %s19, 1
      %p371 = pneg %p40
      %p372 = pneg %p37
      %p373 = scmp.lt.s32.totalorder %s24, 1
      %s374 = scalar_select %p373, %s24, 1
      %s375 = smul.addr %s374, 2
      %s376 = smul.addr %s375, 4
      %s377 = scalar_lea.vmem %s1, %s376
      %p378 = pneg %p66
      %p379 = pneg %p63
      %p380 = pneg %p87
      %p381 = pneg %p84
      %p382 = pneg %p108
      %p383 = pneg %p105
      %p384 = pneg %p129
      %p385 = pneg %p126
      %p386 = pneg %p150
      %p387 = pneg %p147
      %p388 = pneg %p171
      %p389 = pneg %p168
      %p390 = pneg %p192
      %p391 = pneg %p189
      %p392 = pneg %p213
      %p393 = pneg %p210
      %p394 = pneg %p234
      %p395 = pneg %p231
      %p396 = pneg %p255
      %p397 = pneg %p252
      %p398 = pneg %p281
      %p399 = pneg %p278
      %p400 = scmp.lt.s32.totalorder %s24, 1
      %s401 = scalar_select %p400, %s24, 1
      %s402 = smul.addr %s401, 2
      %s403 = smul.addr %s402, 4
      %s404 = scalar_lea.vmem %s11, %s403
      %p405 = pneg %p307
      %p406 = pneg %p304
      %p407 = scmp.lt.s32.totalorder %s24, 1
      %s408 = scalar_select %p407, %s24, 1
      %s409 = smul.addr %s408, 2
      %s410 = smul.addr %s409, 2
      %s411 = scalar_lea.vmem %s12, %s410
      %p412 = scmp.lt.s32.totalorder %s24, 1
      %s413 = scalar_select %p412, %s24, 1
      %s414 = smul.addr %s413, 2
      %s415 = smul.addr %s414, 4
      %s416 = scalar_lea.vmem %s1, %s415
      %p417 = scmp.lt.s32.totalorder %s24, 1
      %s418 = scalar_select %p417, %s24, 1
      %s419 = smul.addr %s418, 2
      %s420 = smul.addr %s419, 4
      %s421 = scalar_lea.vmem %s11, %s420
      %p422 = scmp.lt.s32.totalorder %s24, 1
      %s423 = scalar_select %p422, %s24, 1
      %s424 = smul.addr %s423, 2
      %s425 = smul.addr %s424, 2
      %s426 = scalar_lea.vmem %s12, %s425
      %v428 = vld [vmem:[%s0] sm:$0xff]
      %v429 = vld [vmem:[%s0 + $0x8] sm:$0x3]
      %v430 = vld [vmem:[%s0 + $0x10] sm:$0xff]
      %v431 = vld [vmem:[%s0 + $0x18] sm:$0x3]
      %v432 = vld [vmem:[%s3] sm:$0x1]
      %v433 = vpack.c.bf16 %v430, %v428
      %v434 = vld [vmem:[%s2] sm:$0xf]
      %v435 = vld [vmem:[%s2 + $0x4] sm:$0xf]
      %v438 = vunpack.c.l.b16 %v434
      %v439 = vunpack.c.l.b16 %v435
      %v440 = vpack.c.b16 %v439, %v438
      %vm442 = vcmask 130048
      %v444 = vsel %vm442, %v433, 0
      %446 = vmatpush.bf16.msra.mxu0 0
      %447 = vmatpush.bf16.msra.mxu0 0
      %448 = vmatpush.bf16.msra.mxu0 0
      %449 = vmatpush.bf16.msra.mxu0 0
      %450 = vmatpush.bf16.msra.mxu0 0
      %451 = vmatpush.bf16.msra.mxu0 0
      %452 = vmatpush.bf16.msra.mxu0 0
      %453 = vmatpush.bf16.msra.mxu0 %v440
      %454 = vmatmul.bf16.gmra.mxu0 %v444
      %v455 = vpop.f32.mrf.mxu0
      %v456 = vadd.f32 0.0, %v455
      %v457 = vpop.f32.mrf.mxu0
      %v458 = vadd.f32 0.0, %v457
      %459 = vdwg.mxu0
      %v461 = vperm.slane %v432, 0
      %v463 = vadd.f32 %v461, %v456
      %v464 = vadd.f32 %v461, %v458
      %vm469 = vcmask 1046528
      %v470 = vrot.slane %v428, 1
      %v471 = vrot.slane %v429, 1
      %v472 = vsel %vm469, %v470, %v471
      %v473 = vrot.slane %v430, 1
      %v474 = vrot.slane %v431, 1
      %v475 = vsel %vm469, %v473, %v474
      %v478 = vpack.c.bf16 %v475, %v472
      %s479 = scalar_lea.vmem %s2, 8
      %v480 = vld [vmem:[%s479] sm:$0xf]
      %v481 = vld [vmem:[%s479 + $0x4] sm:$0xf]
      %v484 = vunpack.c.l.b16 %v480
      %v485 = vunpack.c.l.b16 %v481
      %v486 = vpack.c.b16 %v485, %v484
      %v489 = vsel %vm442, %v478, 0
      %491 = vmatpush.bf16.msra.mxu0 0
      %492 = vmatpush.bf16.msra.mxu0 0
      %493 = vmatpush.bf16.msra.mxu0 0
      %494 = vmatpush.bf16.msra.mxu0 0
      %495 = vmatpush.bf16.msra.mxu0 0
      %496 = vmatpush.bf16.msra.mxu0 0
      %497 = vmatpush.bf16.msra.mxu0 0
      %498 = vmatpush.bf16.msra.mxu0 %v486
      %499 = vmatmul.bf16.gmra.mxu0 %v489
      %v500 = vpop.f32.mrf.mxu0
      %v501 = vadd.f32 0.0, %v500
      %v502 = vpop.f32.mrf.mxu0
      %v503 = vadd.f32 0.0, %v502
      %504 = vdwg.mxu0
      %v505 = vadd.f32 %v463, %v501
      %v506 = vadd.f32 %v464, %v503
      %vm507 = vcmask 1045504
      %v508 = vrot.slane %v428, 2
      %v509 = vrot.slane %v429, 2
      %v510 = vsel %vm507, %v508, %v509
      %v511 = vrot.slane %v430, 2
      %v512 = vrot.slane %v431, 2
      %v513 = vsel %vm507, %v511, %v512
      %v516 = vpack.c.bf16 %v513, %v510
      %s517 = scalar_lea.vmem %s2, 16
      %v518 = vld [vmem:[%s517] sm:$0xf]
      %v519 = vld [vmem:[%s517 + $0x4] sm:$0xf]
      %v522 = vunpack.c.l.b16 %v518
      %v523 = vunpack.c.l.b16 %v519
      %v524 = vpack.c.b16 %v523, %v522
      %v527 = vsel %vm442, %v516, 0
      %529 = vmatpush.bf16.msra.mxu0 0
      %530 = vmatpush.bf16.msra.mxu0 0
      %531 = vmatpush.bf16.msra.mxu0 0
      %532 = vmatpush.bf16.msra.mxu0 0
      %533 = vmatpush.bf16.msra.mxu0 0
      %534 = vmatpush.bf16.msra.mxu0 0
      %535 = vmatpush.bf16.msra.mxu0 0
      %536 = vmatpush.bf16.msra.mxu0 %v524
      %537 = vmatmul.bf16.gmra.mxu0 %v527
      %v538 = vpop.f32.mrf.mxu0
      %v539 = vadd.f32 0.0, %v538
      %v540 = vpop.f32.mrf.mxu0
      %v541 = vadd.f32 0.0, %v540
      %542 = vdwg.mxu0
      %v543 = vadd.f32 %v505, %v539
      %v544 = vadd.f32 %v506, %v541
      %v545 = vxor.u32 %v543, 2147483648
      %v546 = vxor.u32 %v544, 2147483648
      %v547 = vmul.f32 %v545, 1.442695
      %v548 = vpow.pop %v547
      %v549 = vmul.f32 %v546, 1.442695
      %v550 = vpow.pop %v549
      %v551 = vadd.f32 %v548, 1.0
      %v552 = vadd.f32 %v550, 1.0
      %v553 = vrcp.pop %v551
      %v554 = vmul.f32 %v551, %v553
      %v555 = vsub.f32 1.0, %v554
      %v556 = vmul.f32 %v553, %v555
      %v557 = vadd.f32 %v553, %v556
      %vm558 = vweird.f32 %v551
      %vm559 = vweird.f32 %v553
      %vm560 = vmor %vm558, %vm559
      %v561 = vsel %vm560, %v553, %v557
      %v562 = vand.u32 2147483647, %v551
      %vm563 = vcmp.eq.f32.partialorder %v562, 8.507059e+37
      %v564 = vand.u32 %v551, 2147483648
      %v565 = vor.u32 1.1754944e-38, %v564
      %v566 = vsel %vm563, %v565, %v561
      %v567 = vmul.f32 1.0, %v566
      %v568 = vrcp.pop %v552
      %v569 = vmul.f32 %v552, %v568
      %v570 = vsub.f32 1.0, %v569
      %v571 = vmul.f32 %v568, %v570
      %v572 = vadd.f32 %v568, %v571
      %vm573 = vweird.f32 %v552
      %vm574 = vweird.f32 %v568
      %vm575 = vmor %vm573, %vm574
      %v576 = vsel %vm575, %v568, %v572
      %v577 = vand.u32 2147483647, %v552
      %vm578 = vcmp.eq.f32.partialorder %v577, 8.507059e+37
      %v579 = vand.u32 %v552, 2147483648
      %v580 = vor.u32 1.1754944e-38, %v579
      %v581 = vsel %vm578, %v580, %v576
      %v582 = vmul.f32 1.0, %v581
      %v583 = vmul.f32 %v472, %v567
      %v584 = vmul.f32 %v475, %v582
      %v585 = vld [vmem:[%s4] sm:$0xff]
      %v586 = vld [vmem:[%s4 + $0x8] sm:$0xff]
      %vm587 = vcmask 64512
      %v589 = vsel %vm587, %v585, 0
      %v592 = vsel %vm587, %v586, 0
      %594 = vmatpush.msra.mxu0 0.0
      %595 = vmatpush.msra.mxu0 0.0
      %596 = vmatpush.msra.mxu0 0.0
      %597 = vmatpush.msra.mxu0 0.0
      %598 = vmatpush.msra.mxu0 0.0
      %599 = vmatpush.msra.mxu0 0.0
      %600 = vmatpush.msra.mxu0 0.0
      %601 = vmatpush.msra.mxu0 0.0
      %602 = vmatpush.msra.mxu0 0.0
      %603 = vmatpush.msra.mxu0 0.0
      %604 = vmatpush.msra.mxu0 0.0
      %605 = vmatpush.msra.mxu0 0.0
      %606 = vmatpush.msra.mxu0 0.0
      %607 = vmatpush.msra.mxu0 0.0
      %608 = vmatpush.msra.mxu0 0.0
      %609 = vmatpush.msra.mxu0 %v583
      %610 = vmatmul.f32.gmra.mxu0 %v589
      %v611 = vpop.f32.mrf.mxu0
      %v612 = vadd.f32 0.0, %v611
      %613 = vmatmul.f32.gmra.mxu0 %v592
      %v614 = vpop.f32.mrf.mxu0
      %v615 = vadd.f32 0.0, %v614
      %616 = vdwg.mxu0
      %617 = vmatpush.msra.mxu0 0.0
      %618 = vmatpush.msra.mxu0 0.0
      %619 = vmatpush.msra.mxu0 0.0
      %620 = vmatpush.msra.mxu0 0.0
      %621 = vmatpush.msra.mxu0 0.0
      %622 = vmatpush.msra.mxu0 0.0
      %623 = vmatpush.msra.mxu0 0.0
      %624 = vmatpush.msra.mxu0 0.0
      %625 = vmatpush.msra.mxu0 0.0
      %626 = vmatpush.msra.mxu0 0.0
      %627 = vmatpush.msra.mxu0 0.0
      %628 = vmatpush.msra.mxu0 0.0
      %629 = vmatpush.msra.mxu0 0.0
      %630 = vmatpush.msra.mxu0 0.0
      %631 = vmatpush.msra.mxu0 0.0
      %632 = vmatpush.msra.mxu0 %v584
      %633 = vmatmul.f32.gmra.mxu0 %v589
      %v634 = vpop.f32.mrf.mxu0
      %v635 = vadd.f32 0.0, %v634
      %636 = vmatmul.f32.gmra.mxu0 %v592
      %v637 = vpop.f32.mrf.mxu0
      %v638 = vadd.f32 0.0, %v637
      %639 = vdwg.mxu0
      %v640 = vpack.c.bf16 %v615, %v612
      %v641 = vpack.c.bf16 %v638, %v635
      %v642 = vld [vmem:[%s5] sm:$0xf]
      %v643 = vld [vmem:[%s5 + $0x4] sm:$0xf]
      %v646 = vunpack.c.l.b16 %v642
      %v647 = vunpack.c.l.b16 %v643
      %v648 = vpack.c.b16 %v647, %v646
      %v651 = vsel %vm442, %v640, 0
      %v654 = vsel %vm442, %v641, 0
      %656 = vmatpush.bf16.msra.mxu0 0
      %657 = vmatpush.bf16.msra.mxu0 0
      %658 = vmatpush.bf16.msra.mxu0 0
      %659 = vmatpush.bf16.msra.mxu0 0
      %660 = vmatpush.bf16.msra.mxu0 0
      %661 = vmatpush.bf16.msra.mxu0 0
      %662 = vmatpush.bf16.msra.mxu0 0
      %663 = vmatpush.bf16.msra.mxu0 %v648
      %664 = vmatmul.bf16.gmra.mxu0 %v651
      %v665 = vpop.f32.mrf.mxu0
      %v666 = vadd.f32 0.0, %v665
      %v667 = vpop.f32.mrf.mxu0
      %v668 = vadd.f32 0.0, %v667
      %669 = vmatmul.bf16.gmra.mxu0 %v654
      %v670 = vpop.f32.mrf.mxu0
      %v671 = vadd.f32 0.0, %v670
      %v672 = vpop.f32.mrf.mxu0
      %v673 = vadd.f32 0.0, %v672
      %674 = vdwg.mxu0
      %v675 = vpack.c.bf16 %v666, %v666
      %v676 = vpack.c.bf16 %v668, %v668
      %v677 = vpack.c.bf16 %v671, %v671
      %v678 = vpack.c.bf16 %v673, %v673
      %v679 = vld [vmem:[%s416] sm:$0xf]
      %v680 = vld [vmem:[%s416 + $0x4] sm:$0xf]
      %v681 = vmul.f32 %v679, 0.35355338
      %v682 = vmul.f32 %v680, 0.35355338
      %v683 = vpack.c.bf16 %v681, %v681
      %v684 = vpack.c.bf16 %v682, %v682
      %v685 = vld [vmem:[%s6] sm:$0x1]
      %v686 = vld [vmem:[%s7] sm:$0x1]
      %v687 = vld [vmem:[%s8] sm:$0x1]
      %v688 = vld [vmem:[%s9] sm:$0x1]
      %v689 = vmul.f32 %v688, %v688
      %v690 = vld [vmem:[%s10] sm:$0xf]
      %v691 = vld [vmem:[%s10 + $0x4] sm:$0xf]
      %v694 = vunpack.c.l.b16 %v675
      %v695 = vunpack.c.l.b16 %v676
      %v696 = vpack.c.b16 %v695, %v694
      %v698 = vsel %vm587, %v683, 0
      %v701 = vsel %vm587, %v696, 0
      %703 = vmatpush.bf16.xpose.msra.mxu0 0
      %704 = vmatpush.bf16.xpose.msra.mxu0 0
      %705 = vmatpush.bf16.xpose.msra.mxu0 0
      %706 = vmatpush.bf16.xpose.msra.mxu0 0
      %707 = vmatpush.bf16.xpose.msra.mxu0 0
      %708 = vmatpush.bf16.xpose.msra.mxu0 0
      %709 = vmatpush.bf16.xpose.msra.mxu0 0
      %710 = vmatpush.bf16.xpose.msra.mxu0 %v701
      %711 = vmatmul.bf16.gmra.mxu0 %v698
      %v712 = vpop.f32.mrf.mxu0
      %v713 = vadd.f32 0.0, %v712
      %v714 = vpop.f32.mrf.mxu0
      %715 = vdwg.mxu0
      %v718 = vunpack.c.l.b16 %v677
      %v719 = vunpack.c.l.b16 %v678
      %v720 = vpack.c.b16 %v719, %v718
      %v722 = vsel %vm587, %v684, 0
      %v725 = vsel %vm587, %v720, 0
      %727 = vmatpush.bf16.xpose.msra.mxu0 0
      %728 = vmatpush.bf16.xpose.msra.mxu0 0
      %729 = vmatpush.bf16.xpose.msra.mxu0 0
      %730 = vmatpush.bf16.xpose.msra.mxu0 0
      %731 = vmatpush.bf16.xpose.msra.mxu0 0
      %732 = vmatpush.bf16.xpose.msra.mxu0 0
      %733 = vmatpush.bf16.xpose.msra.mxu0 0
      %734 = vmatpush.bf16.xpose.msra.mxu0 %v725
      %735 = vmatmul.bf16.gmra.mxu0 %v722
      %v736 = vpop.f32.mrf.mxu0
      %v737 = vadd.f32 0.0, %v736
      %v738 = vpop.f32.mrf.mxu0
      %739 = vdwg.mxu0
      %v741 = vperm.slane %v685, 0
      %v743 = vmul.f32 %v713, %v741
      %v744 = vmul.f32 %v737, %v741
      %vm745 = vcmask 125952
      %v746 = vsel %vm745, %v743, 0.0
      %747 = vadd.xlane.f32.xlu0 %v746
      %v748 = vpop.xlane.xlu0 %747
      %v749 = vsel %vm745, %v744, 0.0
      %750 = vadd.xlane.f32.xlu0 %v749
      %v751 = vpop.xlane.xlu0 %750
      %v752 = vxor.u32 %v748, 2147483648
      %v753 = vxor.u32 %v751, 2147483648
      %v754 = vmul.f32 %v752, 1.442695
      %v755 = vpow.pop %v754
      %v756 = vmul.f32 %v753, 1.442695
      %v757 = vpow.pop %v756
      %v758 = vadd.f32 %v755, 1.0
      %v759 = vadd.f32 %v757, 1.0
      %v760 = vrcp.pop %v758
      %v761 = vmul.f32 %v758, %v760
      %v762 = vsub.f32 1.0, %v761
      %v763 = vmul.f32 %v760, %v762
      %v764 = vadd.f32 %v760, %v763
      %vm765 = vweird.f32 %v758
      %vm766 = vweird.f32 %v760
      %vm767 = vmor %vm765, %vm766
      %v768 = vsel %vm767, %v760, %v764
      %v769 = vand.u32 2147483647, %v758
      %vm770 = vcmp.eq.f32.partialorder %v769, 8.507059e+37
      %v771 = vand.u32 %v758, 2147483648
      %v772 = vor.u32 1.1754944e-38, %v771
      %v773 = vsel %vm770, %v772, %v768
      %v774 = vmul.f32 1.0, %v773
      %v775 = vrcp.pop %v759
      %v776 = vmul.f32 %v759, %v775
      %v777 = vsub.f32 1.0, %v776
      %v778 = vmul.f32 %v775, %v777
      %v779 = vadd.f32 %v775, %v778
      %vm780 = vweird.f32 %v759
      %vm781 = vweird.f32 %v775
      %vm782 = vmor %vm780, %vm781
      %v783 = vsel %vm782, %v775, %v779
      %v784 = vand.u32 2147483647, %v759
      %vm785 = vcmp.eq.f32.partialorder %v784, 8.507059e+37
      %v786 = vand.u32 %v759, 2147483648
      %v787 = vor.u32 1.1754944e-38, %v786
      %v788 = vsel %vm785, %v787, %v783
      %v789 = vmul.f32 1.0, %v788
      %v791 = vperm.slane %v686, 0
      %v793 = vmul.f32 %v713, %v791
      %v794 = vmul.f32 %v737, %v791
      %v795 = vsel %vm745, %v793, 0.0
      %796 = vadd.xlane.f32.xlu0 %v795
      %v797 = vpop.xlane.xlu0 %796
      %v798 = vsel %vm745, %v794, 0.0
      %799 = vadd.xlane.f32.xlu0 %v798
      %v800 = vpop.xlane.xlu0 %799
      %v801 = vmax.f32 %v797, 0.0
      %v802 = vmax.f32 %v800, 0.0
      %vm803 = vcmp.ne.f32.partialorder %v797, %v797
      %vm804 = vcmp.ne.f32.partialorder %v800, %v800
      %v805 = vadd.f32 %v797, 0.0
      %v806 = vadd.f32 %v800, 0.0
      %v807 = vand.u32 2147483647, %v797
      %v808 = vand.u32 2147483647, %v800
      %v809 = vsub.f32 0.0, %v807
      %v810 = vsub.f32 0.0, %v808
      %v811 = vmul.f32 %v809, 1.442695
      %v812 = vpow.pop %v811
      %v813 = vmul.f32 %v810, 1.442695
      %v814 = vpow.pop %v813
      %v815 = vadd.f32 %v812, 1.0
      %v816 = vlog2.pop %v815
      %v817 = vmul.f32 %v816, 0.6931472
      %v818 = vmul.f32 -0.5, %v812
      %v819 = vadd.f32 %v818, 1.0
      %v820 = vmul.f32 %v819, %v812
      %v821 = vand.u32 2147483647, %v812
      %vm822 = vcmp.lt.f32.partialorder %v821, 0.0004427343
      %v823 = vsel %vm822, %v820, %v817
      %v824 = vadd.f32 %v814, 1.0
      %v825 = vlog2.pop %v824
      %v826 = vmul.f32 %v825, 0.6931472
      %v827 = vmul.f32 -0.5, %v814
      %v828 = vadd.f32 %v827, 1.0
      %v829 = vmul.f32 %v828, %v814
      %v830 = vand.u32 2147483647, %v814
      %vm831 = vcmp.lt.f32.partialorder %v830, 0.0004427343
      %v832 = vsel %vm831, %v829, %v826
      %v833 = vadd.f32 %v801, %v823
      %v834 = vadd.f32 %v802, %v832
      %v835 = vsel %vm803, %v805, %v833
      %v836 = vsel %vm804, %v806, %v834
      %v837 = vmax.f32 %v835, 1e-06
      %v838 = vmax.f32 %v836, 1e-06
      %v839 = vlog2.pop %v837
      %v840 = vmul.f32 %v839, 0.6931472
      %v841 = vlog2.pop %v838
      %v842 = vmul.f32 %v841, 0.6931472
      %v843 = vsub.f32 %v837, %v840
      %v844 = vsub.f32 %v838, %v842
      %v845 = vsub.f32 %v843, 1.0
      %v846 = vsub.f32 %v844, 1.0
      %v847 = vmul.f32 %v774, %v774
      %v848 = vmul.f32 %v789, %v789
      %v849 = vadd.f32 %v845, %v847
      %v850 = vadd.f32 %v846, %v848
      %v851 = vmul.f32 %v849, 0.5
      %v852 = vmul.f32 %v850, 0.5
      %v854 = vperm.slane %v689, 0
      %v856 = vadd.f32 %v854, %v837
      %v857 = vadd.f32 %v854, %v838
      %v858 = vrsqrt.pop %v856
      %v859 = vmul.f32 %v858, %v856
      %v860 = vmul.f32 %v859, %v858
      %v861 = vmul.f32 0.5, %v860
      %v862 = vsub.f32 1.5, %v861
      %v863 = vmul.f32 %v858, %v862
      %vm864 = vweird.f32 %v856
      %vm865 = vweird.f32 %v858
      %vm866 = vmor %vm864, %vm865
      %v867 = vsel %vm866, %v858, %v863
      %v868 = vrsqrt.pop %v857
      %v869 = vmul.f32 %v868, %v857
      %v870 = vmul.f32 %v869, %v868
      %v871 = vmul.f32 0.5, %v870
      %v872 = vsub.f32 1.5, %v871
      %v873 = vmul.f32 %v868, %v872
      %vm874 = vweird.f32 %v857
      %vm875 = vweird.f32 %v868
      %vm876 = vmor %vm874, %vm875
      %v877 = vsel %vm876, %v868, %v873
      %v879 = vperm.slane %v687, 0
      %v881 = vsub.f32 %v774, %v879
      %v882 = vsub.f32 %v789, %v879
      %v883 = vmul.f32 %v881, %v867
      %v884 = vmul.f32 %v882, %v877
      %v885 = vmul.f32 %v883, -0.5
      %v886 = vmul.f32 %v884, -0.5
      %v887 = vmul.f32 %v885, %v883
      %v888 = vmul.f32 %v886, %v884
      %v889 = vmul.f32 %v887, 1.442695
      %v890 = vpow.pop %v889
      %v891 = vmul.f32 %v888, 1.442695
      %v892 = vpow.pop %v891
      %v893 = vmul.f32 %v890, 0.3989423
      %v894 = vmul.f32 %v892, 0.3989423
      %v895 = vmul.f32 %v893, %v867
      %v896 = vmul.f32 %v894, %v877
      %v897 = vpack.c.bf16 %v895, %v895
      %v898 = vpack.c.bf16 %v896, %v896
      %899 = vrot.lane.b32.xlu0 %v696, 112
      %v900 = vpop.permute.xlu0 %899
      %v903 = vsel %vm442, %v897, 0
      %905 = vmatpush.bf16.msra.mxu0 0
      %906 = vmatpush.bf16.msra.mxu0 0
      %907 = vmatpush.bf16.msra.mxu0 0
      %908 = vmatpush.bf16.msra.mxu0 0
      %909 = vmatpush.bf16.msra.mxu0 0
      %910 = vmatpush.bf16.msra.mxu0 0
      %911 = vmatpush.bf16.msra.mxu0 0
      %912 = vmatpush.bf16.msra.mxu0 %v900
      %913 = vmatmul.bf16.gmra.mxu0 %v903
      %v914 = vpop.f32.mrf.mxu0
      %v915 = vadd.f32 0.0, %v914
      %v916 = vpop.f32.mrf.mxu0
      %917 = vdwg.mxu0
      %918 = vrot.lane.b32.xlu0 %v720, 112
      %v919 = vpop.permute.xlu0 %918
      %v922 = vsel %vm442, %v898, 0
      %924 = vmatpush.bf16.msra.mxu0 0
      %925 = vmatpush.bf16.msra.mxu0 0
      %926 = vmatpush.bf16.msra.mxu0 0
      %927 = vmatpush.bf16.msra.mxu0 0
      %928 = vmatpush.bf16.msra.mxu0 0
      %929 = vmatpush.bf16.msra.mxu0 0
      %930 = vmatpush.bf16.msra.mxu0 0
      %931 = vmatpush.bf16.msra.mxu0 %v919
      %932 = vmatmul.bf16.gmra.mxu0 %v922
      %v933 = vpop.f32.mrf.mxu0
      %v934 = vadd.f32 0.0, %v933
      %v935 = vpop.f32.mrf.mxu0
      %936 = vdwg.mxu0
      %939 = vst [vmem:[#allocation1] ss:$2 sm:$0xff] %v915
      %s940 = scalar_lea.vmem [#allocation1], 1
      %941 = vst [vmem:[%s940] ss:$2 sm:$0xff] %v934
      %v942 = vld.sshfl [vmem:[#allocation1] sm:$0xff pattern:$0x75316420]
      %v944 = vpack.c.bf16 %v942, %v942
      %v946 = vunpack.c.l.b16 %v683
      %v947 = vpack.c.b16 %v946, %v946
      %948 = vrot.lane.b32.xlu0 %v947, 120
      %v949 = vpop.permute.xlu0 %948
      %950 = vrot.lane.b32.xlu0 %v696, 120
      %v951 = vpop.permute.xlu0 %950
      %v953 = vsel %vm587, %v949, 0
      %v956 = vsel %vm587, %v951, 0
      %958 = vmatpush.bf16.xpose.msra.mxu0 0
      %959 = vmatpush.bf16.xpose.msra.mxu0 0
      %960 = vmatpush.bf16.xpose.msra.mxu0 0
      %961 = vmatpush.bf16.xpose.msra.mxu0 0
      %962 = vmatpush.bf16.xpose.msra.mxu0 0
      %963 = vmatpush.bf16.xpose.msra.mxu0 0
      %964 = vmatpush.bf16.xpose.msra.mxu0 0
      %965 = vmatpush.bf16.xpose.msra.mxu0 %v956
      %966 = vmatmul.bf16.gmra.mxu0 %v953
      %v967 = vpop.f32.mrf.mxu0
      %v968 = vadd.f32 0.0, %v967
      %v969 = vpop.f32.mrf.mxu0
      %970 = vdwg.mxu0
      %v972 = vunpack.c.l.b16 %v684
      %v973 = vpack.c.b16 %v972, %v972
      %974 = vrot.lane.b32.xlu0 %v973, 120
      %v975 = vpop.permute.xlu0 %974
      %976 = vrot.lane.b32.xlu0 %v720, 120
      %v977 = vpop.permute.xlu0 %976
      %v979 = vsel %vm587, %v975, 0
      %v982 = vsel %vm587, %v977, 0
      %984 = vmatpush.bf16.xpose.msra.mxu0 0
      %985 = vmatpush.bf16.xpose.msra.mxu0 0
      %986 = vmatpush.bf16.xpose.msra.mxu0 0
      %987 = vmatpush.bf16.xpose.msra.mxu0 0
      %988 = vmatpush.bf16.xpose.msra.mxu0 0
      %989 = vmatpush.bf16.xpose.msra.mxu0 0
      %990 = vmatpush.bf16.xpose.msra.mxu0 0
      %991 = vmatpush.bf16.xpose.msra.mxu0 %v982
      %992 = vmatmul.bf16.gmra.mxu0 %v979
      %v993 = vpop.f32.mrf.mxu0
      %v994 = vadd.f32 0.0, %v993
      %v995 = vpop.f32.mrf.mxu0
      %996 = vdwg.mxu0
      %v997 = vmul.f32 %v968, %v741
      %v998 = vmul.f32 %v994, %v741
      %v999 = vsel %vm745, %v997, 0.0
      %1000 = vadd.xlane.f32.xlu0 %v999
      %v1001 = vpop.xlane.xlu0 %1000
      %v1002 = vsel %vm745, %v998, 0.0
      %1003 = vadd.xlane.f32.xlu0 %v1002
      %v1004 = vpop.xlane.xlu0 %1003
      %v1005 = vxor.u32 %v1001, 2147483648
      %v1006 = vxor.u32 %v1004, 2147483648
      %v1007 = vmul.f32 %v1005, 1.442695
      %v1008 = vpow.pop %v1007
      %v1009 = vmul.f32 %v1006, 1.442695
      %v1010 = vpow.pop %v1009
      %v1011 = vadd.f32 %v1008, 1.0
      %v1012 = vadd.f32 %v1010, 1.0
      %v1013 = vrcp.pop %v1011
      %v1014 = vmul.f32 %v1011, %v1013
      %v1015 = vsub.f32 1.0, %v1014
      %v1016 = vmul.f32 %v1013, %v1015
      %v1017 = vadd.f32 %v1013, %v1016
      %vm1018 = vweird.f32 %v1011
      %vm1019 = vweird.f32 %v1013
      %vm1020 = vmor %vm1018, %vm1019
      %v1021 = vsel %vm1020, %v1013, %v1017
      %v1022 = vand.u32 2147483647, %v1011
      %vm1023 = vcmp.eq.f32.partialorder %v1022, 8.507059e+37
      %v1024 = vand.u32 %v1011, 2147483648
      %v1025 = vor.u32 1.1754944e-38, %v1024
      %v1026 = vsel %vm1023, %v1025, %v1021
      %v1027 = vmul.f32 1.0, %v1026
      %v1028 = vrcp.pop %v1012
      %v1029 = vmul.f32 %v1012, %v1028
      %v1030 = vsub.f32 1.0, %v1029
      %v1031 = vmul.f32 %v1028, %v1030
      %v1032 = vadd.f32 %v1028, %v1031
      %vm1033 = vweird.f32 %v1012
      %vm1034 = vweird.f32 %v1028
      %vm1035 = vmor %vm1033, %vm1034
      %v1036 = vsel %vm1035, %v1028, %v1032
      %v1037 = vand.u32 2147483647, %v1012
      %vm1038 = vcmp.eq.f32.partialorder %v1037, 8.507059e+37
      %v1039 = vand.u32 %v1012, 2147483648
      %v1040 = vor.u32 1.1754944e-38, %v1039
      %v1041 = vsel %vm1038, %v1040, %v1036
      %v1042 = vmul.f32 1.0, %v1041
      %v1043 = vmul.f32 %v968, %v791
      %v1044 = vmul.f32 %v994, %v791
      %v1045 = vsel %vm745, %v1043, 0.0
      %1046 = vadd.xlane.f32.xlu0 %v1045
      %v1047 = vpop.xlane.xlu0 %1046
      %v1048 = vsel %vm745, %v1044, 0.0
      %1049 = vadd.xlane.f32.xlu0 %v1048
      %v1050 = vpop.xlane.xlu0 %1049
      %v1051 = vmax.f32 %v1047, 0.0
      %v1052 = vmax.f32 %v1050, 0.0
      %vm1053 = vcmp.ne.f32.partialorder %v1047, %v1047
      %vm1054 = vcmp.ne.f32.partialorder %v1050, %v1050
      %v1055 = vadd.f32 %v1047, 0.0
      %v1056 = vadd.f32 %v1050, 0.0
      %v1057 = vand.u32 2147483647, %v1047
      %v1058 = vand.u32 2147483647, %v1050
      %v1059 = vsub.f32 0.0, %v1057
      %v1060 = vsub.f32 0.0, %v1058
      %v1061 = vmul.f32 %v1059, 1.442695
      %v1062 = vpow.pop %v1061
      %v1063 = vmul.f32 %v1060, 1.442695
      %v1064 = vpow.pop %v1063
      %v1065 = vadd.f32 %v1062, 1.0
      %v1066 = vlog2.pop %v1065
      %v1067 = vmul.f32 %v1066, 0.6931472
      %v1068 = vmul.f32 -0.5, %v1062
      %v1069 = vadd.f32 %v1068, 1.0
      %v1070 = vmul.f32 %v1069, %v1062
      %v1071 = vand.u32 2147483647, %v1062
      %vm1072 = vcmp.lt.f32.partialorder %v1071, 0.0004427343
      %v1073 = vsel %vm1072, %v1070, %v1067
      %v1074 = vadd.f32 %v1064, 1.0
      %v1075 = vlog2.pop %v1074
      %v1076 = vmul.f32 %v1075, 0.6931472
      %v1077 = vmul.f32 -0.5, %v1064
      %v1078 = vadd.f32 %v1077, 1.0
      %v1079 = vmul.f32 %v1078, %v1064
      %v1080 = vand.u32 2147483647, %v1064
      %vm1081 = vcmp.lt.f32.partialorder %v1080, 0.0004427343
      %v1082 = vsel %vm1081, %v1079, %v1076
      %v1083 = vadd.f32 %v1051, %v1073
      %v1084 = vadd.f32 %v1052, %v1082
      %v1085 = vsel %vm1053, %v1055, %v1083
      %v1086 = vsel %vm1054, %v1056, %v1084
      %v1087 = vmax.f32 %v1085, 1e-06
      %v1088 = vmax.f32 %v1086, 1e-06
      %v1089 = vlog2.pop %v1087
      %v1090 = vmul.f32 %v1089, 0.6931472
      %v1091 = vlog2.pop %v1088
      %v1092 = vmul.f32 %v1091, 0.6931472
      %v1093 = vsub.f32 %v1087, %v1090
      %v1094 = vsub.f32 %v1088, %v1092
      %v1095 = vsub.f32 %v1093, 1.0
      %v1096 = vsub.f32 %v1094, 1.0
      %v1097 = vmul.f32 %v1027, %v1027
      %v1098 = vmul.f32 %v1042, %v1042
      %v1099 = vadd.f32 %v1095, %v1097
      %v1100 = vadd.f32 %v1096, %v1098
      %v1101 = vmul.f32 %v1099, 0.5
      %v1102 = vmul.f32 %v1100, 0.5
      %v1103 = vadd.f32 %v854, %v1087
      %v1104 = vadd.f32 %v854, %v1088
      %v1105 = vrsqrt.pop %v1103
      %v1106 = vmul.f32 %v1105, %v1103
      %v1107 = vmul.f32 %v1106, %v1105
      %v1108 = vmul.f32 0.5, %v1107
      %v1109 = vsub.f32 1.5, %v1108
      %v1110 = vmul.f32 %v1105, %v1109
      %vm1111 = vweird.f32 %v1103
      %vm1112 = vweird.f32 %v1105
      %vm1113 = vmor %vm1111, %vm1112
      %v1114 = vsel %vm1113, %v1105, %v1110
      %v1115 = vrsqrt.pop %v1104
      %v1116 = vmul.f32 %v1115, %v1104
      %v1117 = vmul.f32 %v1116, %v1115
      %v1118 = vmul.f32 0.5, %v1117
      %v1119 = vsub.f32 1.5, %v1118
      %v1120 = vmul.f32 %v1115, %v1119
      %vm1121 = vweird.f32 %v1104
      %vm1122 = vweird.f32 %v1115
      %vm1123 = vmor %vm1121, %vm1122
      %v1124 = vsel %vm1123, %v1115, %v1120
      %v1125 = vsub.f32 %v1027, %v879
      %v1126 = vsub.f32 %v1042, %v879
      %v1127 = vmul.f32 %v1125, %v1114
      %v1128 = vmul.f32 %v1126, %v1124
      %v1129 = vmul.f32 %v1127, -0.5
      %v1130 = vmul.f32 %v1128, -0.5
      %v1131 = vmul.f32 %v1129, %v1127
      %v1132 = vmul.f32 %v1130, %v1128
      %v1133 = vmul.f32 %v1131, 1.442695
      %v1134 = vpow.pop %v1133
      %v1135 = vmul.f32 %v1132, 1.442695
      %v1136 = vpow.pop %v1135
      %v1137 = vmul.f32 %v1134, 0.3989423
      %v1138 = vmul.f32 %v1136, 0.3989423
      %v1139 = vmul.f32 %v1137, %v1114
      %v1140 = vmul.f32 %v1138, %v1124
      %v1141 = vpack.c.bf16 %v1139, %v1139
      %v1142 = vpack.c.bf16 %v1140, %v1140
      %1143 = vrot.lane.b32.xlu0 %v696, 104
      %v1144 = vpop.permute.xlu0 %1143
      %v1147 = vsel %vm442, %v1141, 0
      %1149 = vmatpush.bf16.msra.mxu0 0
      %1150 = vmatpush.bf16.msra.mxu0 0
      %1151 = vmatpush.bf16.msra.mxu0 0
      %1152 = vmatpush.bf16.msra.mxu0 0
      %1153 = vmatpush.bf16.msra.mxu0 0
      %1154 = vmatpush.bf16.msra.mxu0 0
      %1155 = vmatpush.bf16.msra.mxu0 0
      %1156 = vmatpush.bf16.msra.mxu0 %v1144
      %1157 = vmatmul.bf16.gmra.mxu0 %v1147
      %v1158 = vpop.f32.mrf.mxu0
      %v1159 = vadd.f32 0.0, %v1158
      %v1160 = vpop.f32.mrf.mxu0
      %1161 = vdwg.mxu0
      %1162 = vrot.lane.b32.xlu0 %v720, 104
      %v1163 = vpop.permute.xlu0 %1162
      %v1166 = vsel %vm442, %v1142, 0
      %1168 = vmatpush.bf16.msra.mxu0 0
      %1169 = vmatpush.bf16.msra.mxu0 0
      %1170 = vmatpush.bf16.msra.mxu0 0
      %1171 = vmatpush.bf16.msra.mxu0 0
      %1172 = vmatpush.bf16.msra.mxu0 0
      %1173 = vmatpush.bf16.msra.mxu0 0
      %1174 = vmatpush.bf16.msra.mxu0 0
      %1175 = vmatpush.bf16.msra.mxu0 %v1163
      %1176 = vmatmul.bf16.gmra.mxu0 %v1166
      %v1177 = vpop.f32.mrf.mxu0
      %v1178 = vadd.f32 0.0, %v1177
      %v1179 = vpop.f32.mrf.mxu0
      %1180 = vdwg.mxu0
      %1183 = vst [vmem:[#allocation1] ss:$2 sm:$0xff] %v1159
      %s1184 = scalar_lea.vmem [#allocation1], 1
      %1185 = vst [vmem:[%s1184] ss:$2 sm:$0xff] %v1178
      %v1186 = vld.sshfl [vmem:[#allocation1] sm:$0xff pattern:$0x75316420]
      %v1188 = vpack.c.bf16 %v1186, %v1186
      %v1190 = vsel %vm587, %v1188, 0
      %vm1192 = vcmask 1043456
      %v1194 = vsel %vm1192, %v691, 0
      %1196 = vmatpush.bf16.msra.mxu0 0
      %1197 = vmatpush.bf16.msra.mxu0 0
      %1198 = vmatpush.bf16.msra.mxu0 0
      %1199 = vmatpush.bf16.msra.mxu0 0
      %1200 = vmatpush.bf16.msra.mxu0 0
      %1201 = vmatpush.bf16.msra.mxu0 0
      %1202 = vmatpush.bf16.msra.mxu0 0
      %1203 = vmatpush.bf16.msra.mxu0 %v1194
      %1204 = vmatmul.bf16.gmra.mxu0 %v1190
      %v1205 = vpop.f32.mrf.mxu0
      %v1206 = vadd.f32 0.0, %v1205
      %v1207 = vpop.f32.mrf.mxu0
      %1208 = vdwg.mxu0
      %v1210 = vsel %vm587, %v944, 0
      %v1213 = vsel %vm1192, %v690, 0
      %1215 = vmatpush.bf16.msra.mxu0 0
      %1216 = vmatpush.bf16.msra.mxu0 0
      %1217 = vmatpush.bf16.msra.mxu0 0
      %1218 = vmatpush.bf16.msra.mxu0 0
      %1219 = vmatpush.bf16.msra.mxu0 0
      %1220 = vmatpush.bf16.msra.mxu0 0
      %1221 = vmatpush.bf16.msra.mxu0 0
      %1222 = vmatpush.bf16.msra.mxu0 %v1213
      %1223 = vmatmul.bf16.gmra.mxu0 %v1210
      %v1224 = vpop.f32.mrf.mxu0
      %v1225 = vadd.f32 %v1206, %v1224
      %v1226 = vpop.f32.mrf.mxu0
      %1227 = vdwg.mxu0
      %v1229 = vrot.slane %v1225, 4
      %1231 = vst.msk [vmem:[%s421] sm:$0xf] %vm745, %v1225
      %1232 = vst.msk [vmem:[%s421 + $0x4] sm:$0xf] %vm745, %v1229
      %v1235 = vlaneseq
      %v1236 = vand.u32 %v1235, 127
      %v1237 = vperm.slane %v851, %v1236
      %v1238 = vperm.slane %v852, %v1236
      %v1243 = vperm.slane %v1101, %v1236
      %v1244 = vperm.slane %v1102, %v1236
      %vm1247 = vcmask 1040384
      %v1248 = vsel %vm1247, %v1237, %v1243
      %v1249 = vsel %vm1247, %v1238, %v1244
      %vm1250 = vcmask 25600
      %1251 = vst.msk [vmem:[%s426] sm:$0x3] %vm1250, %v1248
      %1252 = vst.msk [vmem:[%s426 + $0x2] sm:$0x3] %vm1250, %v1249
      %p1253 = scmp.lt.s32.totalorder %s24, 1
      %s1254 = scalar_select %p1253, %s24, 1
      %s1255 = smul.addr %s1254, 2
      %s1256 = smul.addr %s1255, 4
      %s1257 = scalar_lea.vmem %s11, %s1256
      %p1258 = scmp.lt.s32.totalorder %s24, 1
      %s1259 = scalar_select %p1258, %s24, 1
      %s1260 = smul.addr %s1259, 2
      %s1261 = smul.addr %s1260, 2
      %s1262 = scalar_lea.vmem %s12, %s1261
      // Predicated region
      $region65: #{long_term_attention_forward.1} parent=63 // pred_check
        %p1263 = pneg %p278
      $region66: #{long_term_attention_forward.1} parent=63 // pred_check_branch
        %1265 = sbr.rel (%p1263) target = $region68
      $region67: #{long_term_attention_forward.1} parent=63 // pred_region
        _
      $region68: #{long_term_attention_forward.1} parent=63 // pred_fallthru
        _
      // Predicated region
      $region69: #{long_term_attention_forward.1} parent=63 // pred_check
        %p1266 = pneg %p304
      $region70: #{long_term_attention_forward.1} parent=63 // pred_check_branch
        %1268 = sbr.rel (%p1266) target = $region72
      $region71: #{long_term_attention_forward.1} parent=63 // pred_region
        _
      $region72: #{long_term_attention_forward.1} parent=63 // pred_fallthru
        _
    $region64: #{long_term_attention_forward.1} parent=5 // pred_fallthru
      _
    %p1269 = scmp.le.s32.totalorder 2, %s19
    // Predicated region
    $region73: #{long_term_attention_forward.1} parent=5 // pred_check
      %p1270 = pneg %p1269
    $region74: #{long_term_attention_forward.1} parent=5 // pred_check_branch
      %1272 = sbr.rel (%p1270) target = $region76
    $region75: #{long_term_attention_forward.1} parent=5 // pred_region
      %s1273 = ssub.s32 %s19, 2
      // Predicated region
      $region77: #{long_term_attention_forward.1} parent=75 // pred_check
        %p1274 = pneg %p284
      $region78: #{long_term_attention_forward.1} parent=75 // pred_check_branch
        %1276 = sbr.rel (%p1274) target = $region80
      $region79: #{long_term_attention_forward.1} parent=75 // pred_region
        %p1277 = scmp.lt.s32.totalorder %s25, 1
        %s1278 = scalar_select %p1277, %s25, 1
        %s1279 = smul.addr %s1278, 2
        %s1280 = smul.addr %s1279, 4
        %s1281 = scalar_lea.vmem %s11, %s1280
      $region80: #{long_term_attention_forward.1} parent=75 // pred_fallthru
        _
      // Predicated region
      $region81: #{long_term_attention_forward.1} parent=75 // pred_check
        %p1282 = pneg %p310
      $region82: #{long_term_attention_forward.1} parent=75 // pred_check_branch
        %1284 = sbr.rel (%p1282) target = $region84
      $region83: #{long_term_attention_forward.1} parent=75 // pred_region
        %p1285 = scmp.lt.s32.totalorder %s25, 1
        %s1286 = scalar_select %p1285, %s25, 1
        %s1287 = smul.addr %s1286, 2
        %s1288 = smul.addr %s1287, 2
        %s1289 = scalar_lea.vmem %s12, %s1288
      $region84: #{long_term_attention_forward.1} parent=75 // pred_fallthru
        _
    $region76: #{long_term_attention_forward.1} parent=5 // pred_fallthru
      _
  $region6: #{long_term_attention_forward.1} parent=0 // loop_footer
    %s23 = sadd.s32 1, %s19
  $region7: #{long_term_attention_forward.1} parent=0 // loop_footer_branch
    %18 = sbr.rel target = $region3
  $region8: #{long_term_attention_forward.1} parent=0 // loop_exit
    _

</llo_original>
